<compile_context>
chip_gen: v7x
topology: tpu7x:2x2x1
jax: 0.10.0
libtpu: 0.0.40
codegen_flags: <defaults>
</compile_context>

<pallas_src>
import jax
import jax.numpy as jnp
from jax.experimental import pallas as pl
from jax.experimental.pallas import tpu as pltpu

EPS = 1e-6
ADD_PARA_NORM = True                   # exercise the enorm/hnorm (DeepSeek-MTP) branch
VMEM_LIMIT = 32 * 1024 * 1024          # scoped-VMEM budget, safe on v5e/v6e/v7x (64 MiB)


def _rmsnorm(x, w, eps=EPS):
    # x, w in float32
    var = jnp.mean(x * x, axis=-1, keepdims=True)
    return x * jax.lax.rsqrt(var + eps) * w


def _pick_tile(dim, desired, align=128):
    """Largest tile <= desired that divides dim and is a multiple of `align`
    (falls back to the full dim, which always divides)."""
    if dim <= desired:
        return dim
    t = (desired // align) * align
    while t >= align:
        if dim % t == 0:
            return t
        t -= align
    return dim


# --------------------------------------------------------------------------
# Generic tiled bf16 matmul (optional fused residual-add epilogue)
# --------------------------------------------------------------------------
def _matmul_kernel(has_add):
    def kernel(*refs):
        if has_add:
            x_ref, w_ref, add_ref, o_ref, acc_ref = refs
        else:
            x_ref, w_ref, o_ref, acc_ref = refs

        k = pl.program_id(2)

        @pl.when(k == 0)
        def _():
            acc_ref[...] = jnp.zeros_like(acc_ref)

        acc_ref[...] += jnp.dot(x_ref[...], w_ref[...],
                                preferred_element_type=jnp.float32)

        @pl.when(k == pl.num_programs(2) - 1)
        def _():
            r = acc_ref[...]
            if has_add:
                r = r + add_ref[...].astype(jnp.float32)
            o_ref[...] = r.astype(o_ref.dtype)

    return kernel


def tiled_matmul(x, w, add=None, *, out_dtype=jnp.bfloat16, tm=256, tn=512, tk=512):
    """out = x @ w (+ add).  Operands must already be bf16 (weights pre-cast
    once at param-load time); f32 accumulation, M/N/K-tiled grid."""
    M, K = x.shape
    K2, N = w.shape
    assert K == K2
    assert x.dtype == jnp.bfloat16 and w.dtype == jnp.bfloat16
    tm = _pick_tile(M, tm)
    tn = _pick_tile(N, tn)
    tk = _pick_tile(K, tk)
    assert M % tm == 0 and N % tn == 0 and K % tk == 0

    in_specs = [pl.BlockSpec((tm, tk), lambda i, j, k: (i, k)),
                pl.BlockSpec((tk, tn), lambda i, j, k: (k, j))]
    args = [x, w]
    if add is not None:
        assert add.shape == (M, N)
        in_specs.append(pl.BlockSpec((tm, tn), lambda i, j, k: (i, j)))
        args.append(add)

    return pl.pallas_call(
        _matmul_kernel(add is not None),
        out_shape=jax.ShapeDtypeStruct((M, N), out_dtype),
        grid_spec=pltpu.PrefetchScalarGridSpec(
            num_scalar_prefetch=0,
            grid=(M // tm, N // tn, K // tk),
            in_specs=in_specs,
            out_specs=pl.BlockSpec((tm, tn), lambda i, j, k: (i, j)),
            scratch_shapes=[pltpu.VMEM((tm, tn), jnp.float32)]),
        compiler_params=pltpu.CompilerParams(
            dimension_semantics=("parallel", "parallel", "arbitrary"),
            vmem_limit_bytes=VMEM_LIMIT),
    )(*args)


# --------------------------------------------------------------------------
# Kernel 1: EAGLE front end  (optional RMSNorms + split fc matmul + pos==0 mask)
# --------------------------------------------------------------------------
def _make_fuse_fc_kernel(add_para_norm, eps=EPS):
    def kernel(e_ref, h_ref, keep_ref, enorm_ref, hnorm_ref, we_ref, wh_ref,
               out_ref, e_scr, h_scr):
        # Normalize each token block once; cache the normalized bf16 tiles in
        # VMEM scratch across the inner j (output-column) axis.
        @pl.when(pl.program_id(1) == 0)
        def _():
            e = e_ref[...]                                       # (tb, H) bf16
            h = h_ref[...]                                       # (tb, H) bf16
            if add_para_norm:
                e = _rmsnorm(e.astype(jnp.float32), enorm_ref[...], eps)
                h = _rmsnorm(h.astype(jnp.float32), hnorm_ref[...], eps)
            e_scr[...] = e.astype(jnp.bfloat16)
            h_scr[...] = h.astype(jnp.bfloat16)

        # concat([e, h]) @ W_fc  ==  e @ W_fc[:H] + h @ W_fc[H:]  (no 2H concat)
        y = (jnp.dot(e_scr[...], we_ref[...], preferred_element_type=jnp.float32)
             + jnp.dot(h_scr[...], wh_ref[...], preferred_element_type=jnp.float32))
        # inputs_embeds[positions == 0] = 0 is applied to the fc OUTPUT,
        # exactly matching the PyTorch forward ordering (mask after the fc).
        keep = keep_ref[...][:, :1].astype(jnp.float32)          # (tb, 1)
        out_ref[...] = (y * keep).astype(out_ref.dtype)
    return kernel


def eagle_fuse_fc(embeds, prev_hidden, positions, enorm_w, hnorm_w, we, wh,
                  *, add_para_norm, block_t=256, block_n=512):
    T, H = embeds.shape
    assert we.dtype == jnp.bfloat16 and wh.dtype == jnp.bfloat16
    block_t = _pick_tile(T, block_t)
    block_n = _pick_tile(H, block_n)
    assert T % block_t == 0 and H % block_n == 0

    # lane-padded (T, 128) keep multiplier instead of a 1-lane VMEM metadata block
    keep = jnp.broadcast_to((positions != 0).astype(jnp.bfloat16)[:, None], (T, 128))

    return pl.pallas_call(
        _make_fuse_fc_kernel(add_para_norm),
        out_shape=jax.ShapeDtypeStruct((T, H), jnp.bfloat16),
        grid_spec=pltpu.PrefetchScalarGridSpec(
            num_scalar_prefetch=0,
            grid=(T // block_t, H // block_n),
            in_specs=[
                pl.BlockSpec((block_t, H), lambda i, j: (i, 0)),     # embeds
                pl.BlockSpec((block_t, H), lambda i, j: (i, 0)),     # prev hidden
                pl.BlockSpec((block_t, 128), lambda i, j: (i, 0)),   # keep mask
                pl.BlockSpec((1, H), lambda i, j: (0, 0)),           # enorm w
                pl.BlockSpec((1, H), lambda i, j: (0, 0)),           # hnorm w
                pl.BlockSpec((H, block_n), lambda i, j: (0, j)),     # W_fc[:H]
                pl.BlockSpec((H, block_n), lambda i, j: (0, j)),     # W_fc[H:]
            ],
            out_specs=pl.BlockSpec((block_t, block_n), lambda i, j: (i, j)),
            scratch_shapes=[pltpu.VMEM((block_t, H), jnp.bfloat16),
                            pltpu.VMEM((block_t, H), jnp.bfloat16)]),
        compiler_params=pltpu.CompilerParams(
            # j must stay serial within a core so the scratch cache (j==0) is valid.
            dimension_semantics=("parallel", "arbitrary"),
            vmem_limit_bytes=VMEM_LIMIT),
    )(embeds.astype(jnp.bfloat16), prev_hidden.astype(jnp.bfloat16), keep,
      enorm_w.astype(jnp.float32), hnorm_w.astype(jnp.float32), we, wh)


# --------------------------------------------------------------------------
# Attention kernel: grid (head, q-tile); heads read straight from fused QKV,
# output written lane-dense (T, H).  RoPE via roll + sign-folded sin.
# --------------------------------------------------------------------------
def _attn_kernel(scale, tq, half):
    def kernel(q_ref, k_ref, v_ref, cos_ref, sin_ref, bias_ref, o_ref):
        qi = pl.program_id(1)
        row0 = pl.multiple_of(qi * tq, tq)
        cos_q = cos_ref[pl.ds(row0, tq), :]
        sin_q = sin_ref[pl.ds(row0, tq), :]

        q = q_ref[...].astype(jnp.float32) * scale        # fold 1/sqrt(d) into q
        k = k_ref[...].astype(jnp.float32)
        v = v_ref[...]                                    # (T, hd) bf16

        # rot_half(u) == roll(u, half) * [-1...,+1...]; sign folded into `sin`
        qr = q * cos_q + pltpu.roll(q, half, 1) * sin_q
        kr = k * cos_ref[...] + pltpu.roll(k, half, 1) * sin_ref[...]

        # q @ k^T with the K transpose folded into the MXU operand feed.
        s = jax.lax.dot_general(
            qr.astype(jnp.bfloat16), kr.astype(jnp.bfloat16),
            (((1,), (1,)), ((), ())),
            preferred_element_type=jnp.float32)           # (tq, T) f32
        s = s + bias_ref[...]                             # precomputed causal bias

        m = jnp.max(s, axis=-1, keepdims=True)
        p = jnp.exp(s - m)
        l = jnp.sum(p, axis=-1, keepdims=True)
        p = p * pl.reciprocal(l, approx=True)             # divide on the EUP
        o = jnp.dot(p.astype(jnp.bfloat16), v, preferred_element_type=jnp.float32)
        o_ref[...] = o.astype(o_ref.dtype)
    return kernel


def eagle_attention(qkv, cos, sin_signed, causal_bias, *, n_heads, head_dim,
                    tq=256):
    """qkv: (T, 3*H) fused bf16 projection.  Returns lane-dense (T, H) bf16."""
    T = qkv.shape[0]
    H = n_heads * head_dim
    assert qkv.shape[1] == 3 * H
    tq = _pick_tile(T, tq)
    assert T % tq == 0
    half = head_dim // 2
    scale = head_dim ** -0.5

    # per-head column views into the fused (T, 3H) qkv buffer
    q_spec = pl.BlockSpec((tq, head_dim), lambda h, i: (i, h))
    k_spec = pl.BlockSpec((T, head_dim), lambda h, i: (0, n_heads + h))
    v_spec = pl.BlockSpec((T, head_dim), lambda h, i: (0, 2 * n_heads + h))
    tbl_spec = pl.BlockSpec((T, head_dim), lambda h, i: (0, 0))
    bias_spec = pl.BlockSpec((tq, T), lambda h, i: (i, 0))
    out_spec = pl.BlockSpec((tq, head_dim), lambda h, i: (i, h))

    return pl.pallas_call(
        _attn_kernel(scale, tq, half),
        out_shape=jax.ShapeDtypeStruct((T, H), jnp.bfloat16),
        grid_spec=pltpu.PrefetchScalarGridSpec(
            num_scalar_prefetch=0,
            grid=(n_heads, T // tq),
            in_specs=[q_spec, k_spec, v_spec, tbl_spec, tbl_spec, bias_spec],
            out_specs=out_spec),
        compiler_params=pltpu.CompilerParams(
            dimension_semantics=("parallel", "parallel"),
            vmem_limit_bytes=VMEM_LIMIT),
    )(qkv, qkv, qkv, cos, sin_signed, causal_bias)


# --------------------------------------------------------------------------
# O-proj + residual with post-attention RMSNorm fused into the epilogue
# --------------------------------------------------------------------------
def _oproj_norm_kernel(eps=EPS):
    def kernel(a_ref, w_ref, x_ref, nw_ref, r_ref, n_ref, acc_ref):
        k = pl.program_id(1)

        @pl.when(k == 0)
        def _():
            acc_ref[...] = jnp.zeros_like(acc_ref)

        acc_ref[...] += jnp.dot(a_ref[...], w_ref[...],
                                preferred_element_type=jnp.float32)

        @pl.when(k == pl.num_programs(1) - 1)
        def _():
            r = acc_ref[...] + x_ref[...].astype(jnp.float32)
            rb = r.astype(jnp.bfloat16)
            r_ref[...] = rb                                       # resid1 (bf16)
            n_ref[...] = _rmsnorm(rb.astype(jnp.float32), nw_ref[...],
                                  eps).astype(n_ref.dtype)        # RMSNorm(resid1)
    return kernel


def oproj_residual_rmsnorm(attn, wo, residual, norm_w, *, tm=256, tk=512):
    """resid1 = attn @ wo + residual ; normed = RMSNorm(resid1).  tn == H so the
    epilogue sees full rows; removes a (T,H) HBM round-trip + a kernel launch."""
    T, H = attn.shape
    assert attn.dtype == jnp.bfloat16 and wo.dtype == jnp.bfloat16
    tm = _pick_tile(T, tm)
    tk = _pick_tile(H, tk)
    assert T % tm == 0 and H % tk == 0

    return pl.pallas_call(
        _oproj_norm_kernel(),
        out_shape=(jax.ShapeDtypeStruct((T, H), jnp.bfloat16),
                   jax.ShapeDtypeStruct((T, H), jnp.bfloat16)),
        grid_spec=pltpu.PrefetchScalarGridSpec(
            num_scalar_prefetch=0,
            grid=(T // tm, H // tk),
            in_specs=[pl.BlockSpec((tm, tk), lambda i, k: (i, k)),   # attn
                      pl.BlockSpec((tk, H), lambda i, k: (k, 0)),    # wo
                      pl.BlockSpec((tm, H), lambda i, k: (i, 0)),    # residual x
                      pl.BlockSpec((1, H), lambda i, k: (0, 0))],    # norm w
            out_specs=(pl.BlockSpec((tm, H), lambda i, k: (i, 0)),
                       pl.BlockSpec((tm, H), lambda i, k: (i, 0))),
            scratch_shapes=[pltpu.VMEM((tm, H), jnp.float32)]),
        compiler_params=pltpu.CompilerParams(
            dimension_semantics=("parallel", "arbitrary"),
            vmem_limit_bytes=VMEM_LIMIT),
    )(attn, wo, residual, norm_w.astype(jnp.float32))


# --------------------------------------------------------------------------
# Fused gate|up matmul with SwiGLU epilogue (no (T, 2I) HBM round-trip)
# --------------------------------------------------------------------------
def _gu_swiglu_kernel(x_ref, wg_ref, wu_ref, o_ref, accg_ref, accu_ref):
    k = pl.program_id(2)

    @pl.when(k == 0)
    def _():
        accg_ref[...] = jnp.zeros_like(accg_ref)
        accu_ref[...] = jnp.zeros_like(accu_ref)

    x = x_ref[...]
    accg_ref[...] += jnp.dot(x, wg_ref[...], preferred_element_type=jnp.float32)
    accu_ref[...] += jnp.dot(x, wu_ref[...], preferred_element_type=jnp.float32)

    @pl.when(k == pl.num_programs(2) - 1)
    def _():
        g = accg_ref[...].astype(jnp.bfloat16).astype(jnp.float32)
        u = accu_ref[...].astype(jnp.bfloat16).astype(jnp.float32)
        o_ref[...] = (jax.nn.silu(g) * u).astype(o_ref.dtype)


def gateup_swiglu(x, wg, wu, *, tm=256, tn=512, tk=512):
    """silu(x @ wg) * (x @ wu), activation fused into the matmul epilogue."""
    T, H = x.shape
    H2, I = wg.shape
    assert H == H2 and wu.shape == (H, I)
    assert x.dtype == jnp.bfloat16 and wg.dtype == jnp.bfloat16 and wu.dtype == jnp.bfloat16
    tm = _pick_tile(T, tm)
    tn = _pick_tile(I, tn)
    tk = _pick_tile(H, tk)
    assert T % tm == 0 and I % tn == 0 and H % tk == 0

    return pl.pallas_call(
        _gu_swiglu_kernel,
        out_shape=jax.ShapeDtypeStruct((T, I), jnp.bfloat16),
        grid_spec=pltpu.PrefetchScalarGridSpec(
            num_scalar_prefetch=0,
            grid=(T // tm, I // tn, H // tk),
            in_specs=[pl.BlockSpec((tm, tk), lambda i, j, k: (i, k)),
                      pl.BlockSpec((tk, tn), lambda i, j, k: (k, j)),
                      pl.BlockSpec((tk, tn), lambda i, j, k: (k, j))],
            out_specs=pl.BlockSpec((tm, tn), lambda i, j, k: (i, j)),
            scratch_shapes=[pltpu.VMEM((tm, tn), jnp.float32),
                            pltpu.VMEM((tm, tn), jnp.float32)]),
        compiler_params=pltpu.CompilerParams(
            dimension_semantics=("parallel", "parallel", "arbitrary"),
            vmem_limit_bytes=VMEM_LIMIT),
    )(x, wg, wu)


# --------------------------------------------------------------------------
# One decoder layer with EAGLE's norm modifications
# --------------------------------------------------------------------------
def eagle_decoder(x, cos, sin_signed, causal_bias, p, *, n_heads, head_dim):
    # DummyInputLayerNorm: identity — x feeds attention directly; x is the residual.
    qkv = tiled_matmul(x, p["w_qkv"])                           # fused QKV: (T, 3H) bf16
    attn_flat = eagle_attention(qkv, cos, sin_signed, causal_bias,
                                n_heads=n_heads, head_dim=head_dim)  # (T, H) bf16
    # O-proj + residual + post-attention RMSNorm fused
    resid1, normed = oproj_residual_rmsnorm(attn_flat, p["wo"], x, p["panorm_w"])
    # gate|up matmul with SwiGLU epilogue
    act = gateup_swiglu(normed, p["wg"], p["wu"])               # (T, I) bf16
    # down-proj + residual; DummyOutputNorm => x + residual, f32 output
    return tiled_matmul(act, p["wd"], add=resid1, out_dtype=jnp.float32)


# --------------------------------------------------------------------------
# Pure-JAX reference (same math and same bf16 rounding points)
# --------------------------------------------------------------------------
def eagle_forward_ref(input_ids, positions, prev_hidden, cos, sin, p,
                      *, add_para_norm, n_heads, head_dim):
    bf = jnp.bfloat16
    H = n_heads * head_dim
    mm = lambda a, b: jnp.dot(a.astype(bf), b.astype(bf),
                              preferred_element_type=jnp.float32)

    emb = p["embed"][input_ids].astype(bf)
    hid = prev_hidden.astype(bf)
    if add_para_norm:
        e = _rmsnorm(emb.astype(jnp.float32), p["enorm_w"]).astype(bf)
        h = _rmsnorm(hid.astype(jnp.float32), p["hnorm_w"]).astype(bf)
    else:
        e, h = emb, hid
    y = mm(e, p["w_fc_e"]) + mm(h, p["w_fc_h"])
    x = jnp.where((positions == 0)[:, None], 0.0, y).astype(bf)

    T = x.shape[0]
    qkv = mm(x, p["w_qkv"]).astype(bf)
    qh = qkv[:, :H].reshape(T, n_heads, head_dim).transpose(1, 0, 2)
    kh = qkv[:, H:2 * H].reshape(T, n_heads, head_dim).transpose(1, 0, 2)
    vh = qkv[:, 2 * H:].reshape(T, n_heads, head_dim).transpose(1, 0, 2)

    scale = head_dim ** -0.5
    half = head_dim // 2

    def rot_half(u):
        return jnp.concatenate([-u[..., half:], u[..., :half]], axis=-1)

    qf = qh.astype(jnp.float32) * scale
    kf = kh.astype(jnp.float32)
    qr = qf * cos[None] + rot_half(qf) * sin[None]
    kr = kf * cos[None] + rot_half(kf) * sin[None]
    s = jnp.einsum('hqd,hkd->hqk', qr.astype(bf), kr.astype(bf),
                   preferred_element_type=jnp.float32)
    causal = jnp.arange(T)[None, :] <= jnp.arange(T)[:, None]
    s = jnp.where(causal[None], s, -1e30)
    prob = jax.nn.softmax(s, axis=-1)
    o = jnp.einsum('hqk,hkd->hqd', prob.astype(bf), vh,
                   preferred_element_type=jnp.float32).astype(bf)
    attn_flat = o.transpose(1, 0, 2).reshape(T, H)

    resid1 = (mm(attn_flat, p["wo"]) + x.astype(jnp.float32)).astype(bf)
    normed = _rmsnorm(resid1.astype(jnp.float32), p["panorm_w"]).astype(bf)
    g = mm(normed, p["wg"]).astype(bf).astype(jnp.float32)
    u = mm(normed, p["wu"]).astype(bf).astype(jnp.float32)
    act = (jax.nn.silu(g) * u).astype(bf)
    return mm(act, p["wd"]) + resid1.astype(jnp.float32)


# --------------------------------------------------------------------------
if __name__ == "__main__":
    # small but tile-aligned shapes (lane = 128) so vregs are not pure padding
    V, T, H, NH, HD, I = 512, 128, 256, 2, 128, 512
    assert NH * HD == H

    key = jax.random.PRNGKey(0)
    ks = jax.random.split(key, 16)
    s = 0.05
    bf = jnp.bfloat16
    f32 = jnp.float32

    def rnd(k, shape):
        return jax.random.normal(k, shape, f32) * s

    wq, wk, wv = rnd(ks[2], (H, H)), rnd(ks[3], (H, H)), rnd(ks[4], (H, H))
    w_fc = rnd(ks[1], (2 * H, H)).astype(bf)           # pre-cast once at "load time"
    params = {
        "embed":    rnd(ks[0], (V, H)).astype(bf),
        "enorm_w":  jnp.ones((1, H), f32),
        "hnorm_w":  jnp.ones((1, H), f32),
        "panorm_w": jnp.ones((1, H), f32),
        # matmul weights: fused + pre-cast bf16 (no per-call converts)
        "w_fc_e":   w_fc[:H],
        "w_fc_h":   w_fc[H:],
        "w_qkv":    jnp.concatenate([wq, wk, wv], axis=1).astype(bf),
        "wo":       rnd(ks[5], (H, H)).astype(bf),
        "wg":       rnd(ks[6], (H, I)).astype(bf),
        "wu":       rnd(ks[7], (H, I)).astype(bf),
        "wd":       rnd(ks[8], (I, H)).astype(bf),
    }

    input_ids = jax.random.randint(ks[9], (T,), 0, V, dtype=jnp.int32)
    positions = jnp.arange(T, dtype=jnp.int32)                    # position 0 present
    previous_hidden_states = rnd(ks[10], (T, H)) * 10.0           # ~0.5 scale

    # RoPE tables + sign-folded sin + additive causal bias (glue, plain JAX)
    theta = 10000.0
    inv_freq = 1.0 / (theta ** (jnp.arange(0, HD, 2, dtype=f32) / HD))
    freqs = positions.astype(f32)[:, None] * inv_freq[None, :]    # (T, HD/2)
    cos = jnp.concatenate([jnp.cos(freqs)] * 2, axis=-1)          # (T, HD)
    sin = jnp.concatenate([jnp.sin(freqs)] * 2, axis=-1)
    sign = jnp.concatenate([-jnp.ones((HD // 2,), f32), jnp.ones((HD // 2,), f32)])
    sin_signed = sin * sign[None, :]
    causal_bias = jnp.where(jnp.arange(T)[None, :] <= jnp.arange(T)[:, None],
                            0.0, -1e30).astype(f32)               # (T, T) additive mask

    # ---- EAGLE.forward via Pallas kernels ----
    inputs_embeds = params["embed"][input_ids]                    # embedding lookup (glue)
    fused = eagle_fuse_fc(inputs_embeds, previous_hidden_states, positions,
                          params["enorm_w"], params["hnorm_w"],
                          params["w_fc_e"], params["w_fc_h"],
                          add_para_norm=ADD_PARA_NORM)
    hidden_states = eagle_decoder(fused, cos, sin_signed, causal_bias, params,
                                  n_heads=NH, head_dim=HD)
    hidden_states = jax.block_until_ready(hidden_states)

    # ---- verify against pure-JAX reference ----
    ref = eagle_forward_ref(input_ids, positions, previous_hidden_states,
                            cos, sin, params,
                            add_para_norm=ADD_PARA_NORM, n_heads=NH, head_dim=HD)
    assert hidden_states.shape == (T, H)
    err = float(jnp.max(jnp.abs(hidden_states - ref)))
    assert jnp.allclose(hidden_states, ref, rtol=1e-2, atol=1e-2), f"max abs diff {err}"

    print("KERNEL_OK")
</pallas_src>

<mosaic_0001>
module attributes {stable_mosaic.version = 11 : i64} {
  func.func @kernel(%arg0: i32, %arg1: i32, %arg2: memref<128x256xbf16, #tpu.memory_space<vmem>>, %arg3: memref<128x256xbf16, #tpu.memory_space<vmem>>, %arg4: memref<128x128xbf16, #tpu.memory_space<vmem>>, %arg5: memref<1x256xf32, #tpu.memory_space<vmem>>, %arg6: memref<1x256xf32, #tpu.memory_space<vmem>>, %arg7: memref<256x256xbf16, #tpu.memory_space<vmem>>, %arg8: memref<256x256xbf16, #tpu.memory_space<vmem>>, %arg9: memref<128x256xbf16, #tpu.memory_space<vmem>>, %arg10: memref<128x256xbf16, #tpu.memory_space<vmem>>, %arg11: memref<128x256xbf16, #tpu.memory_space<vmem>>) attributes {dimension_semantics = [#tpu.dimension_semantics<parallel>, #tpu.dimension_semantics<arbitrary>], iteration_bounds = array<i64: 1, 1>, scalar_prefetch = 0 : i64, scratch_operands = 2 : i64, tpu.core_type = #tpu.core_type<tc>, window_params = [{transform_indices = @transform_0, window_bounds = array<i64: 128, 256>}, {transform_indices = @transform_1, window_bounds = array<i64: 128, 256>}, {transform_indices = @transform_2, window_bounds = array<i64: 128, 128>}, {pipeline_mode = #tpu.pipeline_mode<synchronous>, transform_indices = @transform_3, window_bounds = array<i64: 1, 256>}, {pipeline_mode = #tpu.pipeline_mode<synchronous>, transform_indices = @transform_4, window_bounds = array<i64: 1, 256>}, {transform_indices = @transform_5, window_bounds = array<i64: 256, 256>}, {transform_indices = @transform_6, window_bounds = array<i64: 256, 256>}, {transform_indices = @transform_7, window_bounds = array<i64: 128, 256>}]} {
    %c0_i32 = arith.constant 0 : i32
    %0 = arith.cmpi eq, %arg1, %c0_i32 : i32
    %1 = arith.extui %0 : i1 to i32
    %c0_i32_0 = arith.constant 0 : i32
    %2 = arith.cmpi ne, %1, %c0_i32_0 : i32
    scf.if %2 {
      %c0_13 = arith.constant 0 : index
      %c0_14 = arith.constant 0 : index
      %17 = vector.load %arg2[%c0_13, %c0_14] : memref<128x256xbf16, #tpu.memory_space<vmem>>, vector<128x256xbf16>
      %c0_15 = arith.constant 0 : index
      %c0_16 = arith.constant 0 : index
      %18 = vector.load %arg3[%c0_15, %c0_16] : memref<128x256xbf16, #tpu.memory_space<vmem>>, vector<128x256xbf16>
      %19 = arith.extf %17 : vector<128x256xbf16> to vector<128x256xf32>
      %c0_17 = arith.constant 0 : index
      %c0_18 = arith.constant 0 : index
      %20 = vector.load %arg5[%c0_17, %c0_18] : memref<1x256xf32, #tpu.memory_space<vmem>>, vector<1x256xf32>
      %21 = arith.mulf %19, %19 : vector<128x256xf32>
      %cst_19 = arith.constant dense<0.000000e+00> : vector<128xf32>
      %22 = vector.multi_reduction <add>, %21, %cst_19 [1] : vector<128x256xf32> to vector<128xf32>
      %23 = vector.shape_cast %22 : vector<128xf32> to vector<128x1xf32>
      %cst_20 = arith.constant 2.560000e+02 : f32
      %24 = vector.broadcast %cst_20 : f32 to vector<128x1xf32>
      %25 = arith.divf %23, %24 : vector<128x1xf32>
      %cst_21 = arith.constant 9.99999997E-7 : f32
      %26 = vector.broadcast %cst_21 : f32 to vector<128x1xf32>
      %27 = arith.addf %25, %26 : vector<128x1xf32>
      %28 = math.rsqrt %27 : vector<128x1xf32>
      %29 = vector.broadcast %28 : vector<128x1xf32> to vector<128x256xf32>
      %30 = arith.mulf %19, %29 : vector<128x256xf32>
      %31 = vector.broadcast %20 : vector<1x256xf32> to vector<128x256xf32>
      %32 = arith.mulf %30, %31 : vector<128x256xf32>
      %33 = arith.extf %18 : vector<128x256xbf16> to vector<128x256xf32>
      %c0_22 = arith.constant 0 : index
      %c0_23 = arith.constant 0 : index
      %34 = vector.load %arg6[%c0_22, %c0_23] : memref<1x256xf32, #tpu.memory_space<vmem>>, vector<1x256xf32>
      %35 = arith.mulf %33, %33 : vector<128x256xf32>
      %cst_24 = arith.constant dense<0.000000e+00> : vector<128xf32>
      %36 = vector.multi_reduction <add>, %35, %cst_24 [1] : vector<128x256xf32> to vector<128xf32>
      %37 = vector.shape_cast %36 : vector<128xf32> to vector<128x1xf32>
      %cst_25 = arith.constant 2.560000e+02 : f32
      %38 = vector.broadcast %cst_25 : f32 to vector<128x1xf32>
      %39 = arith.divf %37, %38 : vector<128x1xf32>
      %cst_26 = arith.constant 9.99999997E-7 : f32
      %40 = vector.broadcast %cst_26 : f32 to vector<128x1xf32>
      %41 = arith.addf %39, %40 : vector<128x1xf32>
      %42 = math.rsqrt %41 : vector<128x1xf32>
      %43 = vector.broadcast %42 : vector<128x1xf32> to vector<128x256xf32>
      %44 = arith.mulf %33, %43 : vector<128x256xf32>
      %45 = vector.broadcast %34 : vector<1x256xf32> to vector<128x256xf32>
      %46 = arith.mulf %44, %45 : vector<128x256xf32>
      %47 = arith.truncf %32 : vector<128x256xf32> to vector<128x256xbf16>
      %c0_27 = arith.constant 0 : index
      %c0_28 = arith.constant 0 : index
      %48 = vector.load %arg10[%c0_27, %c0_28] : memref<128x256xbf16, #tpu.memory_space<vmem>>, vector<128x256xbf16>
      tpu.vector_store %arg10[%c0_27, %c0_28], %47 {strides = array<i32>} : memref<128x256xbf16, #tpu.memory_space<vmem>>, vector<128x256xbf16>,
      %49 = arith.truncf %46 : vector<128x256xf32> to vector<128x256xbf16>
      %c0_29 = arith.constant 0 : index
      %c0_30 = arith.constant 0 : index
      %50 = vector.load %arg11[%c0_29, %c0_30] : memref<128x256xbf16, #tpu.memory_space<vmem>>, vector<128x256xbf16>
      tpu.vector_store %arg11[%c0_29, %c0_30], %49 {strides = array<i32>} : memref<128x256xbf16, #tpu.memory_space<vmem>>, vector<128x256xbf16>,
    } else {
    }
    %c0 = arith.constant 0 : index
    %c0_1 = arith.constant 0 : index
    %3 = vector.load %arg10[%c0, %c0_1] : memref<128x256xbf16, #tpu.memory_space<vmem>>, vector<128x256xbf16>
    %c0_2 = arith.constant 0 : index
    %c0_3 = arith.constant 0 : index
    %4 = vector.load %arg7[%c0_2, %c0_3] : memref<256x256xbf16, #tpu.memory_space<vmem>>, vector<256x256xbf16>
    %cst = arith.constant dense<0.000000e+00> : vector<128x256xf32>
    %5 = tpu.matmul %3, %4, %cst {dimension_numbers = #tpu.dot_dimension_numbers<[1], [0], [0], [1], [0, 0, 1, 1], [], []>} : vector<128x256xbf16>, vector<256x256xbf16>, vector<128x256xf32> -> vector<128x256xf32>
    %c0_4 = arith.constant 0 : index
    %c0_5 = arith.constant 0 : index
    %6 = vector.load %arg11[%c0_4, %c0_5] : memref<128x256xbf16, #tpu.memory_space<vmem>>, vector<128x256xbf16>
    %c0_6 = arith.constant 0 : index
    %c0_7 = arith.constant 0 : index
    %7 = vector.load %arg8[%c0_6, %c0_7] : memref<256x256xbf16, #tpu.memory_space<vmem>>, vector<256x256xbf16>
    %cst_8 = arith.constant dense<0.000000e+00> : vector<128x256xf32>
    %8 = tpu.matmul %6, %7, %cst_8 {dimension_numbers = #tpu.dot_dimension_numbers<[1], [0], [0], [1], [0, 0, 1, 1], [], []>} : vector<128x256xbf16>, vector<256x256xbf16>, vector<128x256xf32> -> vector<128x256xf32>
    %9 = arith.addf %5, %8 : vector<128x256xf32>
    %c0_9 = arith.constant 0 : index
    %c0_10 = arith.constant 0 : index
    %10 = vector.load %arg4[%c0_9, %c0_10] : memref<128x128xbf16, #tpu.memory_space<vmem>>, vector<128x128xbf16>
    %11 = vector.extract_strided_slice %10 {offsets = [0, 0], sizes = [128, 1], strides = [1, 1]} : vector<128x128xbf16> to vector<128x1xbf16>
    %12 = arith.extf %11 : vector<128x1xbf16> to vector<128x1xf32>
    %13 = vector.broadcast %12 : vector<128x1xf32> to vector<128x256xf32>
    %14 = arith.mulf %9, %13 : vector<128x256xf32>
    %15 = arith.truncf %14 : vector<128x256xf32> to vector<128x256xbf16>
    %c0_11 = arith.constant 0 : index
    %c0_12 = arith.constant 0 : index
    %16 = vector.load %arg9[%c0_11, %c0_12] : memref<128x256xbf16, #tpu.memory_space<vmem>>, vector<128x256xbf16>
    tpu.vector_store %arg9[%c0_11, %c0_12], %15 {strides = array<i32>} : memref<128x256xbf16, #tpu.memory_space<vmem>>, vector<128x256xbf16>,
    return
  }
  func.func @transform_0(%arg0: i32, %arg1: i32) -> (i32, i32) {
    %c0_i32 = arith.constant 0 : i32
    %c0_i32_0 = arith.constant 0 : i32
    return %arg0, %c0_i32 : i32, i32
  }
  func.func @transform_1(%arg0: i32, %arg1: i32) -> (i32, i32) {
    %c0_i32 = arith.constant 0 : i32
    %c0_i32_0 = arith.constant 0 : i32
    return %arg0, %c0_i32 : i32, i32
  }
  func.func @transform_2(%arg0: i32, %arg1: i32) -> (i32, i32) {
    %c0_i32 = arith.constant 0 : i32
    %c0_i32_0 = arith.constant 0 : i32
    return %arg0, %c0_i32 : i32, i32
  }
  func.func @transform_3(%arg0: i32, %arg1: i32) -> (i32, i32) {
    %c0_i32 = arith.constant 0 : i32
    %c0_i32_0 = arith.constant 0 : i32
    %c0_i32_1 = arith.constant 0 : i32
    return %c0_i32, %c0_i32_0 : i32, i32
  }
  func.func @transform_4(%arg0: i32, %arg1: i32) -> (i32, i32) {
    %c0_i32 = arith.constant 0 : i32
    %c0_i32_0 = arith.constant 0 : i32
    %c0_i32_1 = arith.constant 0 : i32
    return %c0_i32, %c0_i32_0 : i32, i32
  }
  func.func @transform_5(%arg0: i32, %arg1: i32) -> (i32, i32) {
    %c0_i32 = arith.constant 0 : i32
    %c0_i32_0 = arith.constant 0 : i32
    return %c0_i32, %arg1 : i32, i32
  }
  func.func @transform_6(%arg0: i32, %arg1: i32) -> (i32, i32) {
    %c0_i32 = arith.constant 0 : i32
    %c0_i32_0 = arith.constant 0 : i32
    return %c0_i32, %arg1 : i32, i32
  }
  func.func @transform_7(%arg0: i32, %arg1: i32) -> (i32, i32) {
    %c0_i32 = arith.constant 0 : i32
    return %arg0, %arg1 : i32, i32
  }
}

</mosaic_0001>

<llo_original>
// kernel: tpu_custom_call.1
$region0: #{tpu_custom_call.1}
  #allocation0 [shape = 'u32[]', space=smem, size = 0x4, offset = 0x4, fixed_abs, tag = 'smem constant byte address 0x4 - core index']
  #allocation1 [shape = 'u32[144,128]{1,0:T(1,128)}', space=vmem, size = 0x12000, scoped, tag = 'internal scratch']
  #allocation2 [shape = 'bf16[128,256]{1,0:T(16,128)(2,1)}', space=vmem, size = 0x10000, scoped, tag = 'scratch operand']
  #allocation3 [shape = 'bf16[128,256]{1,0:T(16,128)(2,1)}', space=vmem, size = 0x10000, scoped, tag = 'scratch operand']
  %s0 = inlined_call_operand.hbm [shape: bf16[128,256], index: 0, kind: input, shape index: {}]
  %s1 = inlined_call_operand.hbm [shape: bf16[128,256], index: 1, kind: input, shape index: {}]
  %s2 = inlined_call_operand.hbm [shape: bf16[128,128], index: 2, kind: input, shape index: {}]
  %s3 = inlined_call_operand.vmem [shape: f32[1,256], index: 3, kind: input, shape index: {}]
  %s4 = inlined_call_operand.vmem [shape: f32[1,256], index: 4, kind: input, shape index: {}]
  %s5 = inlined_call_operand.hbm [shape: bf16[256,256], index: 5, kind: input, shape index: {}]
  %s6 = inlined_call_operand.hbm [shape: bf16[256,256], index: 6, kind: input, shape index: {}]
  %s7 = inlined_call_operand.hbm [shape: bf16[128,256], index: 7, kind: output, shape index: {}]
  %s8 = sld [smem:[#allocation0]]
  $region62: #{tpu_custom_call.1} parent=0
    _
  %s10 = ssub.s32 1, %s8
  %s11 = scalar_select 0, %s10, %s8
  $region1: #{tpu_custom_call.1} parent=0
    #allocation4 [shape = 'u8[65536]{0}', space=vmem, size = 0x10000, scoped, tag = 'input window, operand 0, single buffered']
    #allocation5 [shape = 's32[1]{0}', space=sflag, size = 0x4, scoped, tag = 'scoped memory for tpu_custom_call.1']
    #allocation6 [shape = 's32[1]{0}', space=sflag, size = 0x4, scoped, tag = 'scoped memory for tpu_custom_call.1']
    #allocation7 [shape = 'u8[65536]{0}', space=vmem, size = 0x10000, scoped, tag = 'input window, operand 1, single buffered']
    #allocation8 [shape = 's32[1]{0}', space=sflag, size = 0x4, scoped, tag = 'scoped memory for tpu_custom_call.1']
    #allocation9 [shape = 'u8[32768]{0}', space=vmem, size = 0x8000, scoped, tag = 'input window, operand 2, single buffered']
    #allocation10 [shape = 'u8[131072]{0}', space=vmem, size = 0x20000, scoped, tag = 'input window, operand 5, single buffered']
    #allocation11 [shape = 's32[1]{0}', space=sflag, size = 0x4, scoped, tag = 'scoped memory for tpu_custom_call.1']
    #allocation12 [shape = 'u8[131072]{0}', space=vmem, size = 0x20000, scoped, tag = 'input window, operand 6, single buffered']
    #allocation13 [shape = 'u8[65536]{0}', space=vmem, size = 0x10000, scoped, tag = 'output window, operand 0, single buffered']
    %12 = vsyncpa [#allocation5], 0
    %13 = vsyncpa [#allocation8], 0
    %14 = vsyncpa [#allocation11], 0
    %15 = vsyncpa [#allocation6], 0
    // Predicated region
    $region2: #{tpu_custom_call.1} parent=1 // pred_check
      _
    $region3: #{tpu_custom_call.1} parent=1 // pred_check_branch
      %17 = sbr.rel (0) target = $region5
    $region4: #{tpu_custom_call.1} parent=1 // pred_region
      %s19 = ssub.s32 2048, 2048
      %20 = vsyncadd [#allocation5], %s19
      %s21 = sshll.u32 [#allocation4], 4
      %s22 = int_to_ptr.vmem [resolvable:$true] %s21
      %27 = dma.hbm_to_vmem [thread:$0]  %s0, 2048, %s22, [#allocation5], 128, 128, 8
    $region5: #{tpu_custom_call.1} parent=1 // pred_fallthru
      _
    // Predicated region
    $region6: #{tpu_custom_call.1} parent=1 // pred_check
      _
    $region7: #{tpu_custom_call.1} parent=1 // pred_check_branch
      %29 = sbr.rel (0) target = $region9
    $region8: #{tpu_custom_call.1} parent=1 // pred_region
      %s31 = ssub.s32 2048, 2048
      %32 = vsyncadd [#allocation8], %s31
      %s33 = sshll.u32 [#allocation7], 4
      %s34 = int_to_ptr.vmem [resolvable:$true] %s33
      %39 = dma.hbm_to_vmem [thread:$0]  %s1, 2048, %s34, [#allocation8], 128, 128, 8
    $region9: #{tpu_custom_call.1} parent=1 // pred_fallthru
      _
    // Predicated region
    $region10: #{tpu_custom_call.1} parent=1 // pred_check
      _
    $region11: #{tpu_custom_call.1} parent=1 // pred_check_branch
      %41 = sbr.rel (0) target = $region13
    $region12: #{tpu_custom_call.1} parent=1 // pred_region
      %s43 = ssub.s32 1024, 1024
      %44 = vsyncadd [#allocation8], %s43
      %s45 = sshll.u32 [#allocation9], 4
      %s46 = int_to_ptr.vmem [resolvable:$true] %s45
      %51 = dma.hbm_to_vmem [thread:$0]  %s2, 1024, %s46, [#allocation8], 64, 64, 4
    $region13: #{tpu_custom_call.1} parent=1 // pred_fallthru
      _
    // Predicated region
    $region14: #{tpu_custom_call.1} parent=1 // pred_check
      _
    $region15: #{tpu_custom_call.1} parent=1 // pred_check_branch
      %53 = sbr.rel (0) target = $region17
    $region16: #{tpu_custom_call.1} parent=1 // pred_region
      _
    $region17: #{tpu_custom_call.1} parent=1 // pred_fallthru
      _
    // Predicated region
    $region18: #{tpu_custom_call.1} parent=1 // pred_check
      _
    $region19: #{tpu_custom_call.1} parent=1 // pred_check_branch
      %55 = sbr.rel (0) target = $region21
    $region20: #{tpu_custom_call.1} parent=1 // pred_region
      _
    $region21: #{tpu_custom_call.1} parent=1 // pred_fallthru
      _
    // Predicated region
    $region22: #{tpu_custom_call.1} parent=1 // pred_check
      _
    $region23: #{tpu_custom_call.1} parent=1 // pred_check_branch
      %57 = sbr.rel (0) target = $region25
    $region24: #{tpu_custom_call.1} parent=1 // pred_region
      %s59 = ssub.s32 4096, 4096
      %60 = vsyncadd [#allocation11], %s59
      %s61 = sshll.u32 [#allocation10], 4
      %s62 = int_to_ptr.vmem [resolvable:$true] %s61
      %67 = dma.hbm_to_vmem [thread:$0]  %s5, 4096, %s62, [#allocation11], 128, 128, 8
    $region25: #{tpu_custom_call.1} parent=1 // pred_fallthru
      _
    // Predicated region
    $region26: #{tpu_custom_call.1} parent=1 // pred_check
      _
    $region27: #{tpu_custom_call.1} parent=1 // pred_check_branch
      %69 = sbr.rel (0) target = $region29
    $region28: #{tpu_custom_call.1} parent=1 // pred_region
      %s71 = ssub.s32 4096, 4096
      %72 = vsyncadd [#allocation11], %s71
      %s73 = sshll.u32 [#allocation12], 4
      %s74 = int_to_ptr.vmem [resolvable:$true] %s73
      %79 = dma.hbm_to_vmem [thread:$0]  %s6, 4096, %s74, [#allocation11], 128, 128, 8
    $region29: #{tpu_custom_call.1} parent=1 // pred_fallthru
      _
    // Predicated region
    $region30: #{tpu_custom_call.1} parent=1 // pred_check
      _
    $region31: #{tpu_custom_call.1} parent=1 // pred_check_branch
      %81 = sbr.rel (0) target = $region33
    $region32: #{tpu_custom_call.1} parent=1 // pred_region
      %82 = dma.done [#allocation5], 2048
    $region33: #{tpu_custom_call.1} parent=1 // pred_fallthru
      _
    // Predicated region
    $region34: #{tpu_custom_call.1} parent=1 // pred_check
      _
    $region35: #{tpu_custom_call.1} parent=1 // pred_check_branch
      %84 = sbr.rel (0) target = $region37
    $region36: #{tpu_custom_call.1} parent=1 // pred_region
      %85 = dma.done [#allocation8], 2048
    $region37: #{tpu_custom_call.1} parent=1 // pred_fallthru
      _
    // Predicated region
    $region38: #{tpu_custom_call.1} parent=1 // pred_check
      _
    $region39: #{tpu_custom_call.1} parent=1 // pred_check_branch
      %87 = sbr.rel (0) target = $region41
    $region40: #{tpu_custom_call.1} parent=1 // pred_region
      %88 = dma.done [#allocation8], 1024
    $region41: #{tpu_custom_call.1} parent=1 // pred_fallthru
      _
    // Predicated region
    $region42: #{tpu_custom_call.1} parent=1 // pred_check
      _
    $region43: #{tpu_custom_call.1} parent=1 // pred_check_branch
      %90 = sbr.rel (0) target = $region45
    $region44: #{tpu_custom_call.1} parent=1 // pred_region
      %91 = dma.done [#allocation11], 4096
    $region45: #{tpu_custom_call.1} parent=1 // pred_fallthru
      _
    // Predicated region
    $region46: #{tpu_custom_call.1} parent=1 // pred_check
      _
    $region47: #{tpu_custom_call.1} parent=1 // pred_check_branch
      %93 = sbr.rel (0) target = $region49
    $region48: #{tpu_custom_call.1} parent=1 // pred_region
      %94 = dma.done [#allocation11], 4096
    $region49: #{tpu_custom_call.1} parent=1 // pred_fallthru
      _
    %p95 = scmp.eq.s32.totalorder 0, 0
    // Predicated region
    $region50: #{tpu_custom_call.1} parent=1 // pred_check
      %p96 = pneg %p95
    $region51: #{tpu_custom_call.1} parent=1 // pred_check_branch
      %98 = sbr.rel (%p96) target = $region53
    $region52: #{tpu_custom_call.1} parent=1 // pred_region
      %v99 = vld [vmem:[#allocation4] sm:$0xff]
      %v100 = vld [vmem:[#allocation4 + $0x8] sm:$0xff]
      %v101 = vld [vmem:[#allocation4 + $0x10] sm:$0xff]
      %v102 = vld [vmem:[#allocation4 + $0x18] sm:$0xff]
      %v103 = vld [vmem:[#allocation4 + $0x20] sm:$0xff]
      %v104 = vld [vmem:[#allocation4 + $0x28] sm:$0xff]
      %v105 = vld [vmem:[#allocation4 + $0x30] sm:$0xff]
      %v106 = vld [vmem:[#allocation4 + $0x38] sm:$0xff]
      %v107 = vld [vmem:[#allocation4 + $0x40] sm:$0xff]
      %v108 = vld [vmem:[#allocation4 + $0x48] sm:$0xff]
      %v109 = vld [vmem:[#allocation4 + $0x50] sm:$0xff]
      %v110 = vld [vmem:[#allocation4 + $0x58] sm:$0xff]
      %v111 = vld [vmem:[#allocation4 + $0x60] sm:$0xff]
      %v112 = vld [vmem:[#allocation4 + $0x68] sm:$0xff]
      %v113 = vld [vmem:[#allocation4 + $0x70] sm:$0xff]
      %v114 = vld [vmem:[#allocation4 + $0x78] sm:$0xff]
      %v115 = vld [vmem:[#allocation7] sm:$0xff]
      %v116 = vld [vmem:[#allocation7 + $0x8] sm:$0xff]
      %v117 = vld [vmem:[#allocation7 + $0x10] sm:$0xff]
      %v118 = vld [vmem:[#allocation7 + $0x18] sm:$0xff]
      %v119 = vld [vmem:[#allocation7 + $0x20] sm:$0xff]
      %v120 = vld [vmem:[#allocation7 + $0x28] sm:$0xff]
      %v121 = vld [vmem:[#allocation7 + $0x30] sm:$0xff]
      %v122 = vld [vmem:[#allocation7 + $0x38] sm:$0xff]
      %v123 = vld [vmem:[#allocation7 + $0x40] sm:$0xff]
      %v124 = vld [vmem:[#allocation7 + $0x48] sm:$0xff]
      %v125 = vld [vmem:[#allocation7 + $0x50] sm:$0xff]
      %v126 = vld [vmem:[#allocation7 + $0x58] sm:$0xff]
      %v127 = vld [vmem:[#allocation7 + $0x60] sm:$0xff]
      %v128 = vld [vmem:[#allocation7 + $0x68] sm:$0xff]
      %v129 = vld [vmem:[#allocation7 + $0x70] sm:$0xff]
      %v130 = vld [vmem:[#allocation7 + $0x78] sm:$0xff]
      %v131 = vunpack.c.l.bf16 %v99
      %v132 = vunpack.c.h.bf16 %v99
      %v133 = vunpack.c.l.bf16 %v100
      %v134 = vunpack.c.h.bf16 %v100
      %v135 = vunpack.c.l.bf16 %v101
      %v136 = vunpack.c.h.bf16 %v101
      %v137 = vunpack.c.l.bf16 %v102
      %v138 = vunpack.c.h.bf16 %v102
      %v139 = vunpack.c.l.bf16 %v103
      %v140 = vunpack.c.h.bf16 %v103
      %v141 = vunpack.c.l.bf16 %v104
      %v142 = vunpack.c.h.bf16 %v104
      %v143 = vunpack.c.l.bf16 %v105
      %v144 = vunpack.c.h.bf16 %v105
      %v145 = vunpack.c.l.bf16 %v106
      %v146 = vunpack.c.h.bf16 %v106
      %v147 = vunpack.c.l.bf16 %v107
      %v148 = vunpack.c.h.bf16 %v107
      %v149 = vunpack.c.l.bf16 %v108
      %v150 = vunpack.c.h.bf16 %v108
      %v151 = vunpack.c.l.bf16 %v109
      %v152 = vunpack.c.h.bf16 %v109
      %v153 = vunpack.c.l.bf16 %v110
      %v154 = vunpack.c.h.bf16 %v110
      %v155 = vunpack.c.l.bf16 %v111
      %v156 = vunpack.c.h.bf16 %v111
      %v157 = vunpack.c.l.bf16 %v112
      %v158 = vunpack.c.h.bf16 %v112
      %v159 = vunpack.c.l.bf16 %v113
      %v160 = vunpack.c.h.bf16 %v113
      %v161 = vunpack.c.l.bf16 %v114
      %v162 = vunpack.c.h.bf16 %v114
      %v163 = vld [vmem:[%s3] sm:$0x3]
      %v164 = vmul.f32 %v131, %v131
      %v165 = vmul.f32 %v132, %v132
      %v166 = vmul.f32 %v133, %v133
      %v167 = vmul.f32 %v134, %v134
      %v168 = vmul.f32 %v135, %v135
      %v169 = vmul.f32 %v136, %v136
      %v170 = vmul.f32 %v137, %v137
      %v171 = vmul.f32 %v138, %v138
      %v172 = vmul.f32 %v139, %v139
      %v173 = vmul.f32 %v140, %v140
      %v174 = vmul.f32 %v141, %v141
      %v175 = vmul.f32 %v142, %v142
      %v176 = vmul.f32 %v143, %v143
      %v177 = vmul.f32 %v144, %v144
      %v178 = vmul.f32 %v145, %v145
      %v179 = vmul.f32 %v146, %v146
      %v180 = vmul.f32 %v147, %v147
      %v181 = vmul.f32 %v148, %v148
      %v182 = vmul.f32 %v149, %v149
      %v183 = vmul.f32 %v150, %v150
      %v184 = vmul.f32 %v151, %v151
      %v185 = vmul.f32 %v152, %v152
      %v186 = vmul.f32 %v153, %v153
      %v187 = vmul.f32 %v154, %v154
      %v188 = vmul.f32 %v155, %v155
      %v189 = vmul.f32 %v156, %v156
      %v190 = vmul.f32 %v157, %v157
      %v191 = vmul.f32 %v158, %v158
      %v192 = vmul.f32 %v159, %v159
      %v193 = vmul.f32 %v160, %v160
      %v194 = vmul.f32 %v161, %v161
      %v195 = vmul.f32 %v162, %v162
      %v196 = vadd.f32 %v164, %v165
      %197 = vadd.xlane.f32.xlu0 %v196
      %v198 = vpop.xlane.xlu0 %197
      %v199 = vadd.f32 %v166, %v167
      %200 = vadd.xlane.f32.xlu0 %v199
      %v201 = vpop.xlane.xlu0 %200
      %v202 = vadd.f32 %v168, %v169
      %203 = vadd.xlane.f32.xlu0 %v202
      %v204 = vpop.xlane.xlu0 %203
      %v205 = vadd.f32 %v170, %v171
      %206 = vadd.xlane.f32.xlu0 %v205
      %v207 = vpop.xlane.xlu0 %206
      %v208 = vadd.f32 %v172, %v173
      %209 = vadd.xlane.f32.xlu0 %v208
      %v210 = vpop.xlane.xlu0 %209
      %v211 = vadd.f32 %v174, %v175
      %212 = vadd.xlane.f32.xlu0 %v211
      %v213 = vpop.xlane.xlu0 %212
      %v214 = vadd.f32 %v176, %v177
      %215 = vadd.xlane.f32.xlu0 %v214
      %v216 = vpop.xlane.xlu0 %215
      %v217 = vadd.f32 %v178, %v179
      %218 = vadd.xlane.f32.xlu0 %v217
      %v219 = vpop.xlane.xlu0 %218
      %v220 = vadd.f32 %v180, %v181
      %221 = vadd.xlane.f32.xlu0 %v220
      %v222 = vpop.xlane.xlu0 %221
      %v223 = vadd.f32 %v182, %v183
      %224 = vadd.xlane.f32.xlu0 %v223
      %v225 = vpop.xlane.xlu0 %224
      %v226 = vadd.f32 %v184, %v185
      %227 = vadd.xlane.f32.xlu0 %v226
      %v228 = vpop.xlane.xlu0 %227
      %v229 = vadd.f32 %v186, %v187
      %230 = vadd.xlane.f32.xlu0 %v229
      %v231 = vpop.xlane.xlu0 %230
      %v232 = vadd.f32 %v188, %v189
      %233 = vadd.xlane.f32.xlu0 %v232
      %v234 = vpop.xlane.xlu0 %233
      %v235 = vadd.f32 %v190, %v191
      %236 = vadd.xlane.f32.xlu0 %v235
      %v237 = vpop.xlane.xlu0 %236
      %v238 = vadd.f32 %v192, %v193
      %239 = vadd.xlane.f32.xlu0 %v238
      %v240 = vpop.xlane.xlu0 %239
      %v241 = vadd.f32 %v194, %v195
      %242 = vadd.xlane.f32.xlu0 %v241
      %v243 = vpop.xlane.xlu0 %242
      %v244 = vrcp.pop 256.0
      %v245 = vmul.f32 %v198, %v244
      %v246 = vmul.f32 %v201, %v244
      %v247 = vmul.f32 %v204, %v244
      %v248 = vmul.f32 %v207, %v244
      %v249 = vmul.f32 %v210, %v244
      %v250 = vmul.f32 %v213, %v244
      %v251 = vmul.f32 %v216, %v244
      %v252 = vmul.f32 %v219, %v244
      %v253 = vmul.f32 %v222, %v244
      %v254 = vmul.f32 %v225, %v244
      %v255 = vmul.f32 %v228, %v244
      %v256 = vmul.f32 %v231, %v244
      %v257 = vmul.f32 %v234, %v244
      %v258 = vmul.f32 %v237, %v244
      %v259 = vmul.f32 %v240, %v244
      %v260 = vmul.f32 %v243, %v244
      %v261 = vadd.f32 %v245, 1e-06
      %v262 = vadd.f32 %v246, 1e-06
      %v263 = vadd.f32 %v247, 1e-06
      %v264 = vadd.f32 %v248, 1e-06
      %v265 = vadd.f32 %v249, 1e-06
      %v266 = vadd.f32 %v250, 1e-06
      %v267 = vadd.f32 %v251, 1e-06
      %v268 = vadd.f32 %v252, 1e-06
      %v269 = vadd.f32 %v253, 1e-06
      %v270 = vadd.f32 %v254, 1e-06
      %v271 = vadd.f32 %v255, 1e-06
      %v272 = vadd.f32 %v256, 1e-06
      %v273 = vadd.f32 %v257, 1e-06
      %v274 = vadd.f32 %v258, 1e-06
      %v275 = vadd.f32 %v259, 1e-06
      %v276 = vadd.f32 %v260, 1e-06
      %v277 = vrsqrt.pop %v261
      %v278 = vrsqrt.pop %v262
      %v279 = vrsqrt.pop %v263
      %v280 = vrsqrt.pop %v264
      %v281 = vrsqrt.pop %v265
      %v282 = vrsqrt.pop %v266
      %v283 = vrsqrt.pop %v267
      %v284 = vrsqrt.pop %v268
      %v285 = vrsqrt.pop %v269
      %v286 = vrsqrt.pop %v270
      %v287 = vrsqrt.pop %v271
      %v288 = vrsqrt.pop %v272
      %v289 = vrsqrt.pop %v273
      %v290 = vrsqrt.pop %v274
      %v291 = vrsqrt.pop %v275
      %v292 = vrsqrt.pop %v276
      %v293 = vmul.f32 %v131, %v277
      %v294 = vmul.f32 %v132, %v277
      %v295 = vmul.f32 %v133, %v278
      %v296 = vmul.f32 %v134, %v278
      %v297 = vmul.f32 %v135, %v279
      %v298 = vmul.f32 %v136, %v279
      %v299 = vmul.f32 %v137, %v280
      %v300 = vmul.f32 %v138, %v280
      %v301 = vmul.f32 %v139, %v281
      %v302 = vmul.f32 %v140, %v281
      %v303 = vmul.f32 %v141, %v282
      %v304 = vmul.f32 %v142, %v282
      %v305 = vmul.f32 %v143, %v283
      %v306 = vmul.f32 %v144, %v283
      %v307 = vmul.f32 %v145, %v284
      %v308 = vmul.f32 %v146, %v284
      %v309 = vmul.f32 %v147, %v285
      %v310 = vmul.f32 %v148, %v285
      %v311 = vmul.f32 %v149, %v286
      %v312 = vmul.f32 %v150, %v286
      %v313 = vmul.f32 %v151, %v287
      %v314 = vmul.f32 %v152, %v287
      %v315 = vmul.f32 %v153, %v288
      %v316 = vmul.f32 %v154, %v288
      %v317 = vmul.f32 %v155, %v289
      %v318 = vmul.f32 %v156, %v289
      %v319 = vmul.f32 %v157, %v290
      %v320 = vmul.f32 %v158, %v290
      %v321 = vmul.f32 %v159, %v291
      %v322 = vmul.f32 %v160, %v291
      %v323 = vmul.f32 %v161, %v292
      %v324 = vmul.f32 %v162, %v292
      %v326 = vlaneseq
      %v327 = vshrl.u32 %v326, 7
      %v328 = vsub.s32 0, %v327
      %v329 = vrot.slane %v163, %v328
      %v330 = vlaneseq
      %v331 = vshrl.u32 %v330, 7
      %v332 = vsub.s32 1, %v331
      %v333 = vrot.slane %v163, %v332
      %v336 = vmul.f32 %v293, %v329
      %v337 = vmul.f32 %v294, %v333
      %v338 = vmul.f32 %v295, %v329
      %v339 = vmul.f32 %v296, %v333
      %v340 = vmul.f32 %v297, %v329
      %v341 = vmul.f32 %v298, %v333
      %v342 = vmul.f32 %v299, %v329
      %v343 = vmul.f32 %v300, %v333
      %v344 = vmul.f32 %v301, %v329
      %v345 = vmul.f32 %v302, %v333
      %v346 = vmul.f32 %v303, %v329
      %v347 = vmul.f32 %v304, %v333
      %v348 = vmul.f32 %v305, %v329
      %v349 = vmul.f32 %v306, %v333
      %v350 = vmul.f32 %v307, %v329
      %v351 = vmul.f32 %v308, %v333
      %v352 = vmul.f32 %v309, %v329
      %v353 = vmul.f32 %v310, %v333
      %v354 = vmul.f32 %v311, %v329
      %v355 = vmul.f32 %v312, %v333
      %v356 = vmul.f32 %v313, %v329
      %v357 = vmul.f32 %v314, %v333
      %v358 = vmul.f32 %v315, %v329
      %v359 = vmul.f32 %v316, %v333
      %v360 = vmul.f32 %v317, %v329
      %v361 = vmul.f32 %v318, %v333
      %v362 = vmul.f32 %v319, %v329
      %v363 = vmul.f32 %v320, %v333
      %v364 = vmul.f32 %v321, %v329
      %v365 = vmul.f32 %v322, %v333
      %v366 = vmul.f32 %v323, %v329
      %v367 = vmul.f32 %v324, %v333
      %v368 = vunpack.c.l.bf16 %v115
      %v369 = vunpack.c.h.bf16 %v115
      %v370 = vunpack.c.l.bf16 %v116
      %v371 = vunpack.c.h.bf16 %v116
      %v372 = vunpack.c.l.bf16 %v117
      %v373 = vunpack.c.h.bf16 %v117
      %v374 = vunpack.c.l.bf16 %v118
      %v375 = vunpack.c.h.bf16 %v118
      %v376 = vunpack.c.l.bf16 %v119
      %v377 = vunpack.c.h.bf16 %v119
      %v378 = vunpack.c.l.bf16 %v120
      %v379 = vunpack.c.h.bf16 %v120
      %v380 = vunpack.c.l.bf16 %v121
      %v381 = vunpack.c.h.bf16 %v121
      %v382 = vunpack.c.l.bf16 %v122
      %v383 = vunpack.c.h.bf16 %v122
      %v384 = vunpack.c.l.bf16 %v123
      %v385 = vunpack.c.h.bf16 %v123
      %v386 = vunpack.c.l.bf16 %v124
      %v387 = vunpack.c.h.bf16 %v124
      %v388 = vunpack.c.l.bf16 %v125
      %v389 = vunpack.c.h.bf16 %v125
      %v390 = vunpack.c.l.bf16 %v126
      %v391 = vunpack.c.h.bf16 %v126
      %v392 = vunpack.c.l.bf16 %v127
      %v393 = vunpack.c.h.bf16 %v127
      %v394 = vunpack.c.l.bf16 %v128
      %v395 = vunpack.c.h.bf16 %v128
      %v396 = vunpack.c.l.bf16 %v129
      %v397 = vunpack.c.h.bf16 %v129
      %v398 = vunpack.c.l.bf16 %v130
      %v399 = vunpack.c.h.bf16 %v130
      %v400 = vld [vmem:[%s4] sm:$0x3]
      %v401 = vmul.f32 %v368, %v368
      %v402 = vmul.f32 %v369, %v369
      %v403 = vmul.f32 %v370, %v370
      %v404 = vmul.f32 %v371, %v371
      %v405 = vmul.f32 %v372, %v372
      %v406 = vmul.f32 %v373, %v373
      %v407 = vmul.f32 %v374, %v374
      %v408 = vmul.f32 %v375, %v375
      %v409 = vmul.f32 %v376, %v376
      %v410 = vmul.f32 %v377, %v377
      %v411 = vmul.f32 %v378, %v378
      %v412 = vmul.f32 %v379, %v379
      %v413 = vmul.f32 %v380, %v380
      %v414 = vmul.f32 %v381, %v381
      %v415 = vmul.f32 %v382, %v382
      %v416 = vmul.f32 %v383, %v383
      %v417 = vmul.f32 %v384, %v384
      %v418 = vmul.f32 %v385, %v385
      %v419 = vmul.f32 %v386, %v386
      %v420 = vmul.f32 %v387, %v387
      %v421 = vmul.f32 %v388, %v388
      %v422 = vmul.f32 %v389, %v389
      %v423 = vmul.f32 %v390, %v390
      %v424 = vmul.f32 %v391, %v391
      %v425 = vmul.f32 %v392, %v392
      %v426 = vmul.f32 %v393, %v393
      %v427 = vmul.f32 %v394, %v394
      %v428 = vmul.f32 %v395, %v395
      %v429 = vmul.f32 %v396, %v396
      %v430 = vmul.f32 %v397, %v397
      %v431 = vmul.f32 %v398, %v398
      %v432 = vmul.f32 %v399, %v399
      %v433 = vadd.f32 %v401, %v402
      %434 = vadd.xlane.f32.xlu0 %v433
      %v435 = vpop.xlane.xlu0 %434
      %v436 = vadd.f32 %v403, %v404
      %437 = vadd.xlane.f32.xlu0 %v436
      %v438 = vpop.xlane.xlu0 %437
      %v439 = vadd.f32 %v405, %v406
      %440 = vadd.xlane.f32.xlu0 %v439
      %v441 = vpop.xlane.xlu0 %440
      %v442 = vadd.f32 %v407, %v408
      %443 = vadd.xlane.f32.xlu0 %v442
      %v444 = vpop.xlane.xlu0 %443
      %v445 = vadd.f32 %v409, %v410
      %446 = vadd.xlane.f32.xlu0 %v445
      %v447 = vpop.xlane.xlu0 %446
      %v448 = vadd.f32 %v411, %v412
      %449 = vadd.xlane.f32.xlu0 %v448
      %v450 = vpop.xlane.xlu0 %449
      %v451 = vadd.f32 %v413, %v414
      %452 = vadd.xlane.f32.xlu0 %v451
      %v453 = vpop.xlane.xlu0 %452
      %v454 = vadd.f32 %v415, %v416
      %455 = vadd.xlane.f32.xlu0 %v454
      %v456 = vpop.xlane.xlu0 %455
      %v457 = vadd.f32 %v417, %v418
      %458 = vadd.xlane.f32.xlu0 %v457
      %v459 = vpop.xlane.xlu0 %458
      %v460 = vadd.f32 %v419, %v420
      %461 = vadd.xlane.f32.xlu0 %v460
      %v462 = vpop.xlane.xlu0 %461
      %v463 = vadd.f32 %v421, %v422
      %464 = vadd.xlane.f32.xlu0 %v463
      %v465 = vpop.xlane.xlu0 %464
      %v466 = vadd.f32 %v423, %v424
      %467 = vadd.xlane.f32.xlu0 %v466
      %v468 = vpop.xlane.xlu0 %467
      %v469 = vadd.f32 %v425, %v426
      %470 = vadd.xlane.f32.xlu0 %v469
      %v471 = vpop.xlane.xlu0 %470
      %v472 = vadd.f32 %v427, %v428
      %473 = vadd.xlane.f32.xlu0 %v472
      %v474 = vpop.xlane.xlu0 %473
      %v475 = vadd.f32 %v429, %v430
      %476 = vadd.xlane.f32.xlu0 %v475
      %v477 = vpop.xlane.xlu0 %476
      %v478 = vadd.f32 %v431, %v432
      %479 = vadd.xlane.f32.xlu0 %v478
      %v480 = vpop.xlane.xlu0 %479
      %v481 = vmul.f32 %v435, %v244
      %v482 = vmul.f32 %v438, %v244
      %v483 = vmul.f32 %v441, %v244
      %v484 = vmul.f32 %v444, %v244
      %v485 = vmul.f32 %v447, %v244
      %v486 = vmul.f32 %v450, %v244
      %v487 = vmul.f32 %v453, %v244
      %v488 = vmul.f32 %v456, %v244
      %v489 = vmul.f32 %v459, %v244
      %v490 = vmul.f32 %v462, %v244
      %v491 = vmul.f32 %v465, %v244
      %v492 = vmul.f32 %v468, %v244
      %v493 = vmul.f32 %v471, %v244
      %v494 = vmul.f32 %v474, %v244
      %v495 = vmul.f32 %v477, %v244
      %v496 = vmul.f32 %v480, %v244
      %v497 = vadd.f32 %v481, 1e-06
      %v498 = vadd.f32 %v482, 1e-06
      %v499 = vadd.f32 %v483, 1e-06
      %v500 = vadd.f32 %v484, 1e-06
      %v501 = vadd.f32 %v485, 1e-06
      %v502 = vadd.f32 %v486, 1e-06
      %v503 = vadd.f32 %v487, 1e-06
      %v504 = vadd.f32 %v488, 1e-06
      %v505 = vadd.f32 %v489, 1e-06
      %v506 = vadd.f32 %v490, 1e-06
      %v507 = vadd.f32 %v491, 1e-06
      %v508 = vadd.f32 %v492, 1e-06
      %v509 = vadd.f32 %v493, 1e-06
      %v510 = vadd.f32 %v494, 1e-06
      %v511 = vadd.f32 %v495, 1e-06
      %v512 = vadd.f32 %v496, 1e-06
      %v513 = vrsqrt.pop %v497
      %v514 = vrsqrt.pop %v498
      %v515 = vrsqrt.pop %v499
      %v516 = vrsqrt.pop %v500
      %v517 = vrsqrt.pop %v501
      %v518 = vrsqrt.pop %v502
      %v519 = vrsqrt.pop %v503
      %v520 = vrsqrt.pop %v504
      %v521 = vrsqrt.pop %v505
      %v522 = vrsqrt.pop %v506
      %v523 = vrsqrt.pop %v507
      %v524 = vrsqrt.pop %v508
      %v525 = vrsqrt.pop %v509
      %v526 = vrsqrt.pop %v510
      %v527 = vrsqrt.pop %v511
      %v528 = vrsqrt.pop %v512
      %v529 = vmul.f32 %v368, %v513
      %v530 = vmul.f32 %v369, %v513
      %v531 = vmul.f32 %v370, %v514
      %v532 = vmul.f32 %v371, %v514
      %v533 = vmul.f32 %v372, %v515
      %v534 = vmul.f32 %v373, %v515
      %v535 = vmul.f32 %v374, %v516
      %v536 = vmul.f32 %v375, %v516
      %v537 = vmul.f32 %v376, %v517
      %v538 = vmul.f32 %v377, %v517
      %v539 = vmul.f32 %v378, %v518
      %v540 = vmul.f32 %v379, %v518
      %v541 = vmul.f32 %v380, %v519
      %v542 = vmul.f32 %v381, %v519
      %v543 = vmul.f32 %v382, %v520
      %v544 = vmul.f32 %v383, %v520
      %v545 = vmul.f32 %v384, %v521
      %v546 = vmul.f32 %v385, %v521
      %v547 = vmul.f32 %v386, %v522
      %v548 = vmul.f32 %v387, %v522
      %v549 = vmul.f32 %v388, %v523
      %v550 = vmul.f32 %v389, %v523
      %v551 = vmul.f32 %v390, %v524
      %v552 = vmul.f32 %v391, %v524
      %v553 = vmul.f32 %v392, %v525
      %v554 = vmul.f32 %v393, %v525
      %v555 = vmul.f32 %v394, %v526
      %v556 = vmul.f32 %v395, %v526
      %v557 = vmul.f32 %v396, %v527
      %v558 = vmul.f32 %v397, %v527
      %v559 = vmul.f32 %v398, %v528
      %v560 = vmul.f32 %v399, %v528
      %v562 = vlaneseq
      %v563 = vshrl.u32 %v562, 7
      %v564 = vsub.s32 0, %v563
      %v565 = vrot.slane %v400, %v564
      %v566 = vlaneseq
      %v567 = vshrl.u32 %v566, 7
      %v568 = vsub.s32 1, %v567
      %v569 = vrot.slane %v400, %v568
      %v572 = vmul.f32 %v529, %v565
      %v573 = vmul.f32 %v530, %v569
      %v574 = vmul.f32 %v531, %v565
      %v575 = vmul.f32 %v532, %v569
      %v576 = vmul.f32 %v533, %v565
      %v577 = vmul.f32 %v534, %v569
      %v578 = vmul.f32 %v535, %v565
      %v579 = vmul.f32 %v536, %v569
      %v580 = vmul.f32 %v537, %v565
      %v581 = vmul.f32 %v538, %v569
      %v582 = vmul.f32 %v539, %v565
      %v583 = vmul.f32 %v540, %v569
      %v584 = vmul.f32 %v541, %v565
      %v585 = vmul.f32 %v542, %v569
      %v586 = vmul.f32 %v543, %v565
      %v587 = vmul.f32 %v544, %v569
      %v588 = vmul.f32 %v545, %v565
      %v589 = vmul.f32 %v546, %v569
      %v590 = vmul.f32 %v547, %v565
      %v591 = vmul.f32 %v548, %v569
      %v592 = vmul.f32 %v549, %v565
      %v593 = vmul.f32 %v550, %v569
      %v594 = vmul.f32 %v551, %v565
      %v595 = vmul.f32 %v552, %v569
      %v596 = vmul.f32 %v553, %v565
      %v597 = vmul.f32 %v554, %v569
      %v598 = vmul.f32 %v555, %v565
      %v599 = vmul.f32 %v556, %v569
      %v600 = vmul.f32 %v557, %v565
      %v601 = vmul.f32 %v558, %v569
      %v602 = vmul.f32 %v559, %v565
      %v603 = vmul.f32 %v560, %v569
      %v604 = vpack.c.bf16 %v338, %v336
      %v605 = vpack.c.bf16 %v339, %v337
      %v606 = vpack.c.bf16 %v342, %v340
      %v607 = vpack.c.bf16 %v343, %v341
      %v608 = vpack.c.bf16 %v346, %v344
      %v609 = vpack.c.bf16 %v347, %v345
      %v610 = vpack.c.bf16 %v350, %v348
      %v611 = vpack.c.bf16 %v351, %v349
      %v612 = vpack.c.bf16 %v354, %v352
      %v613 = vpack.c.bf16 %v355, %v353
      %v614 = vpack.c.bf16 %v358, %v356
      %v615 = vpack.c.bf16 %v359, %v357
      %v616 = vpack.c.bf16 %v362, %v360
      %v617 = vpack.c.bf16 %v363, %v361
      %v618 = vpack.c.bf16 %v366, %v364
      %v619 = vpack.c.bf16 %v367, %v365
      %620 = vst [vmem:[#allocation2] sm:$0xff] %v604
      %621 = vst [vmem:[#allocation2 + $0x8] sm:$0xff] %v605
      %622 = vst [vmem:[#allocation2 + $0x10] sm:$0xff] %v606
      %623 = vst [vmem:[#allocation2 + $0x18] sm:$0xff] %v607
      %624 = vst [vmem:[#allocation2 + $0x20] sm:$0xff] %v608
      %625 = vst [vmem:[#allocation2 + $0x28] sm:$0xff] %v609
      %626 = vst [vmem:[#allocation2 + $0x30] sm:$0xff] %v610
      %627 = vst [vmem:[#allocation2 + $0x38] sm:$0xff] %v611
      %628 = vst [vmem:[#allocation2 + $0x40] sm:$0xff] %v612
      %629 = vst [vmem:[#allocation2 + $0x48] sm:$0xff] %v613
      %630 = vst [vmem:[#allocation2 + $0x50] sm:$0xff] %v614
      %631 = vst [vmem:[#allocation2 + $0x58] sm:$0xff] %v615
      %632 = vst [vmem:[#allocation2 + $0x60] sm:$0xff] %v616
      %633 = vst [vmem:[#allocation2 + $0x68] sm:$0xff] %v617
      %634 = vst [vmem:[#allocation2 + $0x70] sm:$0xff] %v618
      %635 = vst [vmem:[#allocation2 + $0x78] sm:$0xff] %v619
      %v636 = vpack.c.bf16 %v574, %v572
      %v637 = vpack.c.bf16 %v575, %v573
      %v638 = vpack.c.bf16 %v578, %v576
      %v639 = vpack.c.bf16 %v579, %v577
      %v640 = vpack.c.bf16 %v582, %v580
      %v641 = vpack.c.bf16 %v583, %v581
      %v642 = vpack.c.bf16 %v586, %v584
      %v643 = vpack.c.bf16 %v587, %v585
      %v644 = vpack.c.bf16 %v590, %v588
      %v645 = vpack.c.bf16 %v591, %v589
      %v646 = vpack.c.bf16 %v594, %v592
      %v647 = vpack.c.bf16 %v595, %v593
      %v648 = vpack.c.bf16 %v598, %v596
      %v649 = vpack.c.bf16 %v599, %v597
      %v650 = vpack.c.bf16 %v602, %v600
      %v651 = vpack.c.bf16 %v603, %v601
      %652 = vst [vmem:[#allocation3] sm:$0xff] %v636
      %653 = vst [vmem:[#allocation3 + $0x8] sm:$0xff] %v637
      %654 = vst [vmem:[#allocation3 + $0x10] sm:$0xff] %v638
      %655 = vst [vmem:[#allocation3 + $0x18] sm:$0xff] %v639
      %656 = vst [vmem:[#allocation3 + $0x20] sm:$0xff] %v640
      %657 = vst [vmem:[#allocation3 + $0x28] sm:$0xff] %v641
      %658 = vst [vmem:[#allocation3 + $0x30] sm:$0xff] %v642
      %659 = vst [vmem:[#allocation3 + $0x38] sm:$0xff] %v643
      %660 = vst [vmem:[#allocation3 + $0x40] sm:$0xff] %v644
      %661 = vst [vmem:[#allocation3 + $0x48] sm:$0xff] %v645
      %662 = vst [vmem:[#allocation3 + $0x50] sm:$0xff] %v646
      %663 = vst [vmem:[#allocation3 + $0x58] sm:$0xff] %v647
      %664 = vst [vmem:[#allocation3 + $0x60] sm:$0xff] %v648
      %665 = vst [vmem:[#allocation3 + $0x68] sm:$0xff] %v649
      %666 = vst [vmem:[#allocation3 + $0x70] sm:$0xff] %v650
      %667 = vst [vmem:[#allocation3 + $0x78] sm:$0xff] %v651
    $region53: #{tpu_custom_call.1} parent=1 // pred_fallthru
      _
    %v668 = vld [vmem:[#allocation2] sm:$0xff]
    %v669 = vld [vmem:[#allocation2 + $0x8] sm:$0xff]
    %v670 = vld [vmem:[#allocation2 + $0x10] sm:$0xff]
    %v671 = vld [vmem:[#allocation2 + $0x18] sm:$0xff]
    %v672 = vld [vmem:[#allocation2 + $0x20] sm:$0xff]
    %v673 = vld [vmem:[#allocation2 + $0x28] sm:$0xff]
    %v674 = vld [vmem:[#allocation2 + $0x30] sm:$0xff]
    %v675 = vld [vmem:[#allocation2 + $0x38] sm:$0xff]
    %v676 = vld [vmem:[#allocation2 + $0x40] sm:$0xff]
    %v677 = vld [vmem:[#allocation2 + $0x48] sm:$0xff]
    %v678 = vld [vmem:[#allocation2 + $0x50] sm:$0xff]
    %v679 = vld [vmem:[#allocation2 + $0x58] sm:$0xff]
    %v680 = vld [vmem:[#allocation2 + $0x60] sm:$0xff]
    %v681 = vld [vmem:[#allocation2 + $0x68] sm:$0xff]
    %v682 = vld [vmem:[#allocation2 + $0x70] sm:$0xff]
    %v683 = vld [vmem:[#allocation2 + $0x78] sm:$0xff]
    %v684 = vld [vmem:[#allocation10] sm:$0xff]
    %v685 = vld [vmem:[#allocation10 + $0x8] sm:$0xff]
    %v686 = vld [vmem:[#allocation10 + $0x10] sm:$0xff]
    %v687 = vld [vmem:[#allocation10 + $0x18] sm:$0xff]
    %v688 = vld [vmem:[#allocation10 + $0x20] sm:$0xff]
    %v689 = vld [vmem:[#allocation10 + $0x28] sm:$0xff]
    %v690 = vld [vmem:[#allocation10 + $0x30] sm:$0xff]
    %v691 = vld [vmem:[#allocation10 + $0x38] sm:$0xff]
    %v692 = vld [vmem:[#allocation10 + $0x40] sm:$0xff]
    %v693 = vld [vmem:[#allocation10 + $0x48] sm:$0xff]
    %v694 = vld [vmem:[#allocation10 + $0x50] sm:$0xff]
    %v695 = vld [vmem:[#allocation10 + $0x58] sm:$0xff]
    %v696 = vld [vmem:[#allocation10 + $0x60] sm:$0xff]
    %v697 = vld [vmem:[#allocation10 + $0x68] sm:$0xff]
    %v698 = vld [vmem:[#allocation10 + $0x70] sm:$0xff]
    %v699 = vld [vmem:[#allocation10 + $0x78] sm:$0xff]
    %v700 = vld [vmem:[#allocation10 + $0x80] sm:$0xff]
    %v701 = vld [vmem:[#allocation10 + $0x88] sm:$0xff]
    %v702 = vld [vmem:[#allocation10 + $0x90] sm:$0xff]
    %v703 = vld [vmem:[#allocation10 + $0x98] sm:$0xff]
    %v704 = vld [vmem:[#allocation10 + $0xa0] sm:$0xff]
    %v705 = vld [vmem:[#allocation10 + $0xa8] sm:$0xff]
    %v706 = vld [vmem:[#allocation10 + $0xb0] sm:$0xff]
    %v707 = vld [vmem:[#allocation10 + $0xb8] sm:$0xff]
    %v708 = vld [vmem:[#allocation10 + $0xc0] sm:$0xff]
    %v709 = vld [vmem:[#allocation10 + $0xc8] sm:$0xff]
    %v710 = vld [vmem:[#allocation10 + $0xd0] sm:$0xff]
    %v711 = vld [vmem:[#allocation10 + $0xd8] sm:$0xff]
    %v712 = vld [vmem:[#allocation10 + $0xe0] sm:$0xff]
    %v713 = vld [vmem:[#allocation10 + $0xe8] sm:$0xff]
    %v714 = vld [vmem:[#allocation10 + $0xf0] sm:$0xff]
    %v715 = vld [vmem:[#allocation10 + $0xf8] sm:$0xff]
    %v716 = vld [vmem:[#allocation3] sm:$0xff]
    %v717 = vld [vmem:[#allocation3 + $0x8] sm:$0xff]
    %v718 = vld [vmem:[#allocation3 + $0x10] sm:$0xff]
    %v719 = vld [vmem:[#allocation3 + $0x18] sm:$0xff]
    %v720 = vld [vmem:[#allocation3 + $0x20] sm:$0xff]
    %v721 = vld [vmem:[#allocation3 + $0x28] sm:$0xff]
    %v722 = vld [vmem:[#allocation3 + $0x30] sm:$0xff]
    %v723 = vld [vmem:[#allocation3 + $0x38] sm:$0xff]
    %v724 = vld [vmem:[#allocation3 + $0x40] sm:$0xff]
    %v725 = vld [vmem:[#allocation3 + $0x48] sm:$0xff]
    %v726 = vld [vmem:[#allocation3 + $0x50] sm:$0xff]
    %v727 = vld [vmem:[#allocation3 + $0x58] sm:$0xff]
    %v728 = vld [vmem:[#allocation3 + $0x60] sm:$0xff]
    %v729 = vld [vmem:[#allocation3 + $0x68] sm:$0xff]
    %v730 = vld [vmem:[#allocation3 + $0x70] sm:$0xff]
    %v731 = vld [vmem:[#allocation3 + $0x78] sm:$0xff]
    %v732 = vld [vmem:[#allocation12] sm:$0xff]
    %v733 = vld [vmem:[#allocation12 + $0x8] sm:$0xff]
    %v734 = vld [vmem:[#allocation12 + $0x10] sm:$0xff]
    %v735 = vld [vmem:[#allocation12 + $0x18] sm:$0xff]
    %v736 = vld [vmem:[#allocation12 + $0x20] sm:$0xff]
    %v737 = vld [vmem:[#allocation12 + $0x28] sm:$0xff]
    %v738 = vld [vmem:[#allocation12 + $0x30] sm:$0xff]
    %v739 = vld [vmem:[#allocation12 + $0x38] sm:$0xff]
    %v740 = vld [vmem:[#allocation12 + $0x40] sm:$0xff]
    %v741 = vld [vmem:[#allocation12 + $0x48] sm:$0xff]
    %v742 = vld [vmem:[#allocation12 + $0x50] sm:$0xff]
    %v743 = vld [vmem:[#allocation12 + $0x58] sm:$0xff]
    %v744 = vld [vmem:[#allocation12 + $0x60] sm:$0xff]
    %v745 = vld [vmem:[#allocation12 + $0x68] sm:$0xff]
    %v746 = vld [vmem:[#allocation12 + $0x70] sm:$0xff]
    %v747 = vld [vmem:[#allocation12 + $0x78] sm:$0xff]
    %v748 = vld [vmem:[#allocation12 + $0x80] sm:$0xff]
    %v749 = vld [vmem:[#allocation12 + $0x88] sm:$0xff]
    %v750 = vld [vmem:[#allocation12 + $0x90] sm:$0xff]
    %v751 = vld [vmem:[#allocation12 + $0x98] sm:$0xff]
    %v752 = vld [vmem:[#allocation12 + $0xa0] sm:$0xff]
    %v753 = vld [vmem:[#allocation12 + $0xa8] sm:$0xff]
    %v754 = vld [vmem:[#allocation12 + $0xb0] sm:$0xff]
    %v755 = vld [vmem:[#allocation12 + $0xb8] sm:$0xff]
    %v756 = vld [vmem:[#allocation12 + $0xc0] sm:$0xff]
    %v757 = vld [vmem:[#allocation12 + $0xc8] sm:$0xff]
    %v758 = vld [vmem:[#allocation12 + $0xd0] sm:$0xff]
    %v759 = vld [vmem:[#allocation12 + $0xd8] sm:$0xff]
    %v760 = vld [vmem:[#allocation12 + $0xe0] sm:$0xff]
    %v761 = vld [vmem:[#allocation12 + $0xe8] sm:$0xff]
    %v762 = vld [vmem:[#allocation12 + $0xf0] sm:$0xff]
    %v763 = vld [vmem:[#allocation12 + $0xf8] sm:$0xff]
    %v796 = vunpack.c.l.b16 %v732
    %v797 = vunpack.c.h.b16 %v732
    %v798 = vunpack.c.l.b16 %v733
    %v799 = vunpack.c.h.b16 %v733
    %v800 = vunpack.c.l.b16 %v734
    %v801 = vunpack.c.h.b16 %v734
    %v802 = vunpack.c.l.b16 %v735
    %v803 = vunpack.c.h.b16 %v735
    %v804 = vunpack.c.l.b16 %v736
    %v805 = vunpack.c.h.b16 %v736
    %v806 = vunpack.c.l.b16 %v737
    %v807 = vunpack.c.h.b16 %v737
    %v808 = vunpack.c.l.b16 %v738
    %v809 = vunpack.c.h.b16 %v738
    %v810 = vunpack.c.l.b16 %v739
    %v811 = vunpack.c.h.b16 %v739
    %v812 = vunpack.c.l.b16 %v740
    %v813 = vunpack.c.h.b16 %v740
    %v814 = vunpack.c.l.b16 %v741
    %v815 = vunpack.c.h.b16 %v741
    %v816 = vunpack.c.l.b16 %v742
    %v817 = vunpack.c.h.b16 %v742
    %v818 = vunpack.c.l.b16 %v743
    %v819 = vunpack.c.h.b16 %v743
    %v820 = vunpack.c.l.b16 %v744
    %v821 = vunpack.c.h.b16 %v744
    %v822 = vunpack.c.l.b16 %v745
    %v823 = vunpack.c.h.b16 %v745
    %v824 = vunpack.c.l.b16 %v746
    %v825 = vunpack.c.h.b16 %v746
    %v826 = vunpack.c.l.b16 %v747
    %v827 = vunpack.c.h.b16 %v747
    %v828 = vunpack.c.l.b16 %v748
    %v829 = vunpack.c.h.b16 %v748
    %v830 = vunpack.c.l.b16 %v749
    %v831 = vunpack.c.h.b16 %v749
    %v832 = vunpack.c.l.b16 %v750
    %v833 = vunpack.c.h.b16 %v750
    %v834 = vunpack.c.l.b16 %v751
    %v835 = vunpack.c.h.b16 %v751
    %v836 = vunpack.c.l.b16 %v752
    %v837 = vunpack.c.h.b16 %v752
    %v838 = vunpack.c.l.b16 %v753
    %v839 = vunpack.c.h.b16 %v753
    %v840 = vunpack.c.l.b16 %v754
    %v841 = vunpack.c.h.b16 %v754
    %v842 = vunpack.c.l.b16 %v755
    %v843 = vunpack.c.h.b16 %v755
    %v844 = vunpack.c.l.b16 %v756
    %v845 = vunpack.c.h.b16 %v756
    %v846 = vunpack.c.l.b16 %v757
    %v847 = vunpack.c.h.b16 %v757
    %v848 = vunpack.c.l.b16 %v758
    %v849 = vunpack.c.h.b16 %v758
    %v850 = vunpack.c.l.b16 %v759
    %v851 = vunpack.c.h.b16 %v759
    %v852 = vunpack.c.l.b16 %v760
    %v853 = vunpack.c.h.b16 %v760
    %v854 = vunpack.c.l.b16 %v761
    %v855 = vunpack.c.h.b16 %v761
    %v856 = vunpack.c.l.b16 %v762
    %v857 = vunpack.c.h.b16 %v762
    %v858 = vunpack.c.l.b16 %v763
    %v859 = vunpack.c.h.b16 %v763
    %v860 = vpack.c.b16 %v798, %v796
    %v861 = vpack.c.b16 %v799, %v797
    %v862 = vpack.c.b16 %v802, %v800
    %v863 = vpack.c.b16 %v803, %v801
    %v864 = vpack.c.b16 %v806, %v804
    %v865 = vpack.c.b16 %v807, %v805
    %v866 = vpack.c.b16 %v810, %v808
    %v867 = vpack.c.b16 %v811, %v809
    %v868 = vpack.c.b16 %v814, %v812
    %v869 = vpack.c.b16 %v815, %v813
    %v870 = vpack.c.b16 %v818, %v816
    %v871 = vpack.c.b16 %v819, %v817
    %v872 = vpack.c.b16 %v822, %v820
    %v873 = vpack.c.b16 %v823, %v821
    %v874 = vpack.c.b16 %v826, %v824
    %v875 = vpack.c.b16 %v827, %v825
    %v876 = vpack.c.b16 %v830, %v828
    %v877 = vpack.c.b16 %v831, %v829
    %v878 = vpack.c.b16 %v834, %v832
    %v879 = vpack.c.b16 %v835, %v833
    %v880 = vpack.c.b16 %v838, %v836
    %v881 = vpack.c.b16 %v839, %v837
    %v882 = vpack.c.b16 %v842, %v840
    %v883 = vpack.c.b16 %v843, %v841
    %v884 = vpack.c.b16 %v846, %v844
    %v885 = vpack.c.b16 %v847, %v845
    %v886 = vpack.c.b16 %v850, %v848
    %v887 = vpack.c.b16 %v851, %v849
    %v888 = vpack.c.b16 %v854, %v852
    %v889 = vpack.c.b16 %v855, %v853
    %v890 = vpack.c.b16 %v858, %v856
    %v891 = vpack.c.b16 %v859, %v857
    %924 = vmatprep.subr.bf16.mxu0 %v861
    %925 = vmatpush1.bf16.msra.mxu0 %v860
    %926 = vmatprep.subr.bf16.mxu0 %v863
    %927 = vmatpush1.bf16.msra.mxu0 %v862
    %928 = vmatprep.subr.bf16.mxu0 %v865
    %929 = vmatpush1.bf16.msra.mxu0 %v864
    %930 = vmatprep.subr.bf16.mxu0 %v867
    %931 = vmatpush1.bf16.msra.mxu0 %v866
    %932 = vmatprep.subr.bf16.mxu0 %v869
    %933 = vmatpush1.bf16.msra.mxu0 %v868
    %934 = vmatprep.subr.bf16.mxu0 %v871
    %935 = vmatpush1.bf16.msra.mxu0 %v870
    %936 = vmatprep.subr.bf16.mxu0 %v873
    %937 = vmatpush1.bf16.msra.mxu0 %v872
    %938 = vmatprep.subr.bf16.mxu0 %v875
    %939 = vmatpush1.bf16.msra.mxu0 %v874
    %940 = vmatprep.subr.bf16.mxu0 %v877
    %941 = vmatpush1.bf16.msra.mxu0 %v876
    %942 = vmatprep.subr.bf16.mxu0 %v879
    %943 = vmatpush1.bf16.msra.mxu0 %v878
    %944 = vmatprep.subr.bf16.mxu0 %v881
    %945 = vmatpush1.bf16.msra.mxu0 %v880
    %946 = vmatprep.subr.bf16.mxu0 %v883
    %947 = vmatpush1.bf16.msra.mxu0 %v882
    %948 = vmatprep.subr.bf16.mxu0 %v885
    %949 = vmatpush1.bf16.msra.mxu0 %v884
    %950 = vmatprep.subr.bf16.mxu0 %v887
    %951 = vmatpush1.bf16.msra.mxu0 %v886
    %952 = vmatprep.subr.bf16.mxu0 %v889
    %953 = vmatpush1.bf16.msra.mxu0 %v888
    %954 = vmatprep.subr.bf16.mxu0 %v891
    %955 = vmatpush1.bf16.msra.mxu0 %v890
    %956 = vmatprep.mubr.bf16.mxu0 %v717
    %957 = vmatmul.mubr.bf16.gmra.mrb[0].mxu0 %v716
    %v958 = vpop.f32.mrb[0].mxu0
    %v959 = vadd.f32 0.0, %v958
    %v960 = vpop.f32.mrb[0].mxu0
    %v961 = vadd.f32 0.0, %v960
    %v962 = vpop.f32.mrb[0].mxu0
    %v963 = vadd.f32 0.0, %v962
    %v964 = vpop.f32.mrb[0].mxu0
    %v965 = vadd.f32 0.0, %v964
    %966 = vmatprep.mubr.bf16.mxu0 %v719
    %967 = vmatmul.mubr.bf16.gmra.mrb[0].mxu0 %v718
    %v968 = vpop.f32.mrb[0].mxu0
    %v969 = vadd.f32 0.0, %v968
    %v970 = vpop.f32.mrb[0].mxu0
    %v971 = vadd.f32 0.0, %v970
    %v972 = vpop.f32.mrb[0].mxu0
    %v973 = vadd.f32 0.0, %v972
    %v974 = vpop.f32.mrb[0].mxu0
    %v975 = vadd.f32 0.0, %v974
    %976 = vmatprep.mubr.bf16.mxu0 %v721
    %977 = vmatmul.mubr.bf16.gmra.mrb[0].mxu0 %v720
    %v978 = vpop.f32.mrb[0].mxu0
    %v979 = vadd.f32 0.0, %v978
    %v980 = vpop.f32.mrb[0].mxu0
    %v981 = vadd.f32 0.0, %v980
    %v982 = vpop.f32.mrb[0].mxu0
    %v983 = vadd.f32 0.0, %v982
    %v984 = vpop.f32.mrb[0].mxu0
    %v985 = vadd.f32 0.0, %v984
    %986 = vmatprep.mubr.bf16.mxu0 %v723
    %987 = vmatmul.mubr.bf16.gmra.mrb[0].mxu0 %v722
    %v988 = vpop.f32.mrb[0].mxu0
    %v989 = vadd.f32 0.0, %v988
    %v990 = vpop.f32.mrb[0].mxu0
    %v991 = vadd.f32 0.0, %v990
    %v992 = vpop.f32.mrb[0].mxu0
    %v993 = vadd.f32 0.0, %v992
    %v994 = vpop.f32.mrb[0].mxu0
    %v995 = vadd.f32 0.0, %v994
    %996 = vmatprep.mubr.bf16.mxu0 %v725
    %997 = vmatmul.mubr.bf16.gmra.mrb[0].mxu0 %v724
    %v998 = vpop.f32.mrb[0].mxu0
    %v999 = vadd.f32 0.0, %v998
    %v1000 = vpop.f32.mrb[0].mxu0
    %v1001 = vadd.f32 0.0, %v1000
    %v1002 = vpop.f32.mrb[0].mxu0
    %v1003 = vadd.f32 0.0, %v1002
    %v1004 = vpop.f32.mrb[0].mxu0
    %v1005 = vadd.f32 0.0, %v1004
    %1006 = vmatprep.mubr.bf16.mxu0 %v727
    %1007 = vmatmul.mubr.bf16.gmra.mrb[0].mxu0 %v726
    %v1008 = vpop.f32.mrb[0].mxu0
    %v1009 = vadd.f32 0.0, %v1008
    %v1010 = vpop.f32.mrb[0].mxu0
    %v1011 = vadd.f32 0.0, %v1010
    %v1012 = vpop.f32.mrb[0].mxu0
    %v1013 = vadd.f32 0.0, %v1012
    %v1014 = vpop.f32.mrb[0].mxu0
    %v1015 = vadd.f32 0.0, %v1014
    %1016 = vmatprep.mubr.bf16.mxu0 %v729
    %1017 = vmatmul.mubr.bf16.gmra.mrb[0].mxu0 %v728
    %v1018 = vpop.f32.mrb[0].mxu0
    %v1019 = vadd.f32 0.0, %v1018
    %v1020 = vpop.f32.mrb[0].mxu0
    %v1021 = vadd.f32 0.0, %v1020
    %v1022 = vpop.f32.mrb[0].mxu0
    %v1023 = vadd.f32 0.0, %v1022
    %v1024 = vpop.f32.mrb[0].mxu0
    %v1025 = vadd.f32 0.0, %v1024
    %1026 = vmatprep.mubr.bf16.mxu0 %v731
    %1027 = vmatmul.mubr.bf16.gmra.mrb[0].mxu0 %v730
    %v1028 = vpop.f32.mrb[0].mxu0
    %v1029 = vadd.f32 0.0, %v1028
    %v1030 = vpop.f32.mrb[0].mxu0
    %v1031 = vadd.f32 0.0, %v1030
    %v1032 = vpop.f32.mrb[0].mxu0
    %v1033 = vadd.f32 0.0, %v1032
    %v1034 = vpop.f32.mrb[0].mxu0
    %v1035 = vadd.f32 0.0, %v1034
    %1036 = vdwg.mxu0
    %v1069 = vunpack.c.l.b16 %v684
    %v1070 = vunpack.c.h.b16 %v684
    %v1071 = vunpack.c.l.b16 %v685
    %v1072 = vunpack.c.h.b16 %v685
    %v1073 = vunpack.c.l.b16 %v686
    %v1074 = vunpack.c.h.b16 %v686
    %v1075 = vunpack.c.l.b16 %v687
    %v1076 = vunpack.c.h.b16 %v687
    %v1077 = vunpack.c.l.b16 %v688
    %v1078 = vunpack.c.h.b16 %v688
    %v1079 = vunpack.c.l.b16 %v689
    %v1080 = vunpack.c.h.b16 %v689
    %v1081 = vunpack.c.l.b16 %v690
    %v1082 = vunpack.c.h.b16 %v690
    %v1083 = vunpack.c.l.b16 %v691
    %v1084 = vunpack.c.h.b16 %v691
    %v1085 = vunpack.c.l.b16 %v692
    %v1086 = vunpack.c.h.b16 %v692
    %v1087 = vunpack.c.l.b16 %v693
    %v1088 = vunpack.c.h.b16 %v693
    %v1089 = vunpack.c.l.b16 %v694
    %v1090 = vunpack.c.h.b16 %v694
    %v1091 = vunpack.c.l.b16 %v695
    %v1092 = vunpack.c.h.b16 %v695
    %v1093 = vunpack.c.l.b16 %v696
    %v1094 = vunpack.c.h.b16 %v696
    %v1095 = vunpack.c.l.b16 %v697
    %v1096 = vunpack.c.h.b16 %v697
    %v1097 = vunpack.c.l.b16 %v698
    %v1098 = vunpack.c.h.b16 %v698
    %v1099 = vunpack.c.l.b16 %v699
    %v1100 = vunpack.c.h.b16 %v699
    %v1101 = vunpack.c.l.b16 %v700
    %v1102 = vunpack.c.h.b16 %v700
    %v1103 = vunpack.c.l.b16 %v701
    %v1104 = vunpack.c.h.b16 %v701
    %v1105 = vunpack.c.l.b16 %v702
    %v1106 = vunpack.c.h.b16 %v702
    %v1107 = vunpack.c.l.b16 %v703
    %v1108 = vunpack.c.h.b16 %v703
    %v1109 = vunpack.c.l.b16 %v704
    %v1110 = vunpack.c.h.b16 %v704
    %v1111 = vunpack.c.l.b16 %v705
    %v1112 = vunpack.c.h.b16 %v705
    %v1113 = vunpack.c.l.b16 %v706
    %v1114 = vunpack.c.h.b16 %v706
    %v1115 = vunpack.c.l.b16 %v707
    %v1116 = vunpack.c.h.b16 %v707
    %v1117 = vunpack.c.l.b16 %v708
    %v1118 = vunpack.c.h.b16 %v708
    %v1119 = vunpack.c.l.b16 %v709
    %v1120 = vunpack.c.h.b16 %v709
    %v1121 = vunpack.c.l.b16 %v710
    %v1122 = vunpack.c.h.b16 %v710
    %v1123 = vunpack.c.l.b16 %v711
    %v1124 = vunpack.c.h.b16 %v711
    %v1125 = vunpack.c.l.b16 %v712
    %v1126 = vunpack.c.h.b16 %v712
    %v1127 = vunpack.c.l.b16 %v713
    %v1128 = vunpack.c.h.b16 %v713
    %v1129 = vunpack.c.l.b16 %v714
    %v1130 = vunpack.c.h.b16 %v714
    %v1131 = vunpack.c.l.b16 %v715
    %v1132 = vunpack.c.h.b16 %v715
    %v1133 = vpack.c.b16 %v1071, %v1069
    %v1134 = vpack.c.b16 %v1072, %v1070
    %v1135 = vpack.c.b16 %v1075, %v1073
    %v1136 = vpack.c.b16 %v1076, %v1074
    %v1137 = vpack.c.b16 %v1079, %v1077
    %v1138 = vpack.c.b16 %v1080, %v1078
    %v1139 = vpack.c.b16 %v1083, %v1081
    %v1140 = vpack.c.b16 %v1084, %v1082
    %v1141 = vpack.c.b16 %v1087, %v1085
    %v1142 = vpack.c.b16 %v1088, %v1086
    %v1143 = vpack.c.b16 %v1091, %v1089
    %v1144 = vpack.c.b16 %v1092, %v1090
    %v1145 = vpack.c.b16 %v1095, %v1093
    %v1146 = vpack.c.b16 %v1096, %v1094
    %v1147 = vpack.c.b16 %v1099, %v1097
    %v1148 = vpack.c.b16 %v1100, %v1098
    %v1149 = vpack.c.b16 %v1103, %v1101
    %v1150 = vpack.c.b16 %v1104, %v1102
    %v1151 = vpack.c.b16 %v1107, %v1105
    %v1152 = vpack.c.b16 %v1108, %v1106
    %v1153 = vpack.c.b16 %v1111, %v1109
    %v1154 = vpack.c.b16 %v1112, %v1110
    %v1155 = vpack.c.b16 %v1115, %v1113
    %v1156 = vpack.c.b16 %v1116, %v1114
    %v1157 = vpack.c.b16 %v1119, %v1117
    %v1158 = vpack.c.b16 %v1120, %v1118
    %v1159 = vpack.c.b16 %v1123, %v1121
    %v1160 = vpack.c.b16 %v1124, %v1122
    %v1161 = vpack.c.b16 %v1127, %v1125
    %v1162 = vpack.c.b16 %v1128, %v1126
    %v1163 = vpack.c.b16 %v1131, %v1129
    %v1164 = vpack.c.b16 %v1132, %v1130
    %1197 = vmatprep.subr.bf16.mxu0 %v1134
    %1198 = vmatpush1.bf16.msra.mxu0 %v1133
    %1199 = vmatprep.subr.bf16.mxu0 %v1136
    %1200 = vmatpush1.bf16.msra.mxu0 %v1135
    %1201 = vmatprep.subr.bf16.mxu0 %v1138
    %1202 = vmatpush1.bf16.msra.mxu0 %v1137
    %1203 = vmatprep.subr.bf16.mxu0 %v1140
    %1204 = vmatpush1.bf16.msra.mxu0 %v1139
    %1205 = vmatprep.subr.bf16.mxu0 %v1142
    %1206 = vmatpush1.bf16.msra.mxu0 %v1141
    %1207 = vmatprep.subr.bf16.mxu0 %v1144
    %1208 = vmatpush1.bf16.msra.mxu0 %v1143
    %1209 = vmatprep.subr.bf16.mxu0 %v1146
    %1210 = vmatpush1.bf16.msra.mxu0 %v1145
    %1211 = vmatprep.subr.bf16.mxu0 %v1148
    %1212 = vmatpush1.bf16.msra.mxu0 %v1147
    %1213 = vmatprep.subr.bf16.mxu0 %v1150
    %1214 = vmatpush1.bf16.msra.mxu0 %v1149
    %1215 = vmatprep.subr.bf16.mxu0 %v1152
    %1216 = vmatpush1.bf16.msra.mxu0 %v1151
    %1217 = vmatprep.subr.bf16.mxu0 %v1154
    %1218 = vmatpush1.bf16.msra.mxu0 %v1153
    %1219 = vmatprep.subr.bf16.mxu0 %v1156
    %1220 = vmatpush1.bf16.msra.mxu0 %v1155
    %1221 = vmatprep.subr.bf16.mxu0 %v1158
    %1222 = vmatpush1.bf16.msra.mxu0 %v1157
    %1223 = vmatprep.subr.bf16.mxu0 %v1160
    %1224 = vmatpush1.bf16.msra.mxu0 %v1159
    %1225 = vmatprep.subr.bf16.mxu0 %v1162
    %1226 = vmatpush1.bf16.msra.mxu0 %v1161
    %1227 = vmatprep.subr.bf16.mxu0 %v1164
    %1228 = vmatpush1.bf16.msra.mxu0 %v1163
    %1229 = vmatprep.mubr.bf16.mxu0 %v669
    %1230 = vmatmul.mubr.bf16.gmra.mrb[0].mxu0 %v668
    %v1231 = vpop.f32.mrb[0].mxu0
    %v1232 = vadd.f32 %v959, %v1231
    %v1233 = vpop.f32.mrb[0].mxu0
    %v1234 = vadd.f32 %v961, %v1233
    %v1235 = vpop.f32.mrb[0].mxu0
    %v1236 = vadd.f32 %v963, %v1235
    %v1237 = vpop.f32.mrb[0].mxu0
    %v1238 = vadd.f32 %v965, %v1237
    %1239 = vmatprep.mubr.bf16.mxu0 %v671
    %1240 = vmatmul.mubr.bf16.gmra.mrb[0].mxu0 %v670
    %v1241 = vpop.f32.mrb[0].mxu0
    %v1242 = vadd.f32 %v969, %v1241
    %v1243 = vpop.f32.mrb[0].mxu0
    %v1244 = vadd.f32 %v971, %v1243
    %v1245 = vpop.f32.mrb[0].mxu0
    %v1246 = vadd.f32 %v973, %v1245
    %v1247 = vpop.f32.mrb[0].mxu0
    %v1248 = vadd.f32 %v975, %v1247
    %1249 = vmatprep.mubr.bf16.mxu0 %v673
    %1250 = vmatmul.mubr.bf16.gmra.mrb[0].mxu0 %v672
    %v1251 = vpop.f32.mrb[0].mxu0
    %v1252 = vadd.f32 %v979, %v1251
    %v1253 = vpop.f32.mrb[0].mxu0
    %v1254 = vadd.f32 %v981, %v1253
    %v1255 = vpop.f32.mrb[0].mxu0
    %v1256 = vadd.f32 %v983, %v1255
    %v1257 = vpop.f32.mrb[0].mxu0
    %v1258 = vadd.f32 %v985, %v1257
    %1259 = vmatprep.mubr.bf16.mxu0 %v675
    %1260 = vmatmul.mubr.bf16.gmra.mrb[0].mxu0 %v674
    %v1261 = vpop.f32.mrb[0].mxu0
    %v1262 = vadd.f32 %v989, %v1261
    %v1263 = vpop.f32.mrb[0].mxu0
    %v1264 = vadd.f32 %v991, %v1263
    %v1265 = vpop.f32.mrb[0].mxu0
    %v1266 = vadd.f32 %v993, %v1265
    %v1267 = vpop.f32.mrb[0].mxu0
    %v1268 = vadd.f32 %v995, %v1267
    %1269 = vmatprep.mubr.bf16.mxu0 %v677
    %1270 = vmatmul.mubr.bf16.gmra.mrb[0].mxu0 %v676
    %v1271 = vpop.f32.mrb[0].mxu0
    %v1272 = vadd.f32 %v999, %v1271
    %v1273 = vpop.f32.mrb[0].mxu0
    %v1274 = vadd.f32 %v1001, %v1273
    %v1275 = vpop.f32.mrb[0].mxu0
    %v1276 = vadd.f32 %v1003, %v1275
    %v1277 = vpop.f32.mrb[0].mxu0
    %v1278 = vadd.f32 %v1005, %v1277
    %1279 = vmatprep.mubr.bf16.mxu0 %v679
    %1280 = vmatmul.mubr.bf16.gmra.mrb[0].mxu0 %v678
    %v1281 = vpop.f32.mrb[0].mxu0
    %v1282 = vadd.f32 %v1009, %v1281
    %v1283 = vpop.f32.mrb[0].mxu0
    %v1284 = vadd.f32 %v1011, %v1283
    %v1285 = vpop.f32.mrb[0].mxu0
    %v1286 = vadd.f32 %v1013, %v1285
    %v1287 = vpop.f32.mrb[0].mxu0
    %v1288 = vadd.f32 %v1015, %v1287
    %1289 = vmatprep.mubr.bf16.mxu0 %v681
    %1290 = vmatmul.mubr.bf16.gmra.mrb[0].mxu0 %v680
    %v1291 = vpop.f32.mrb[0].mxu0
    %v1292 = vadd.f32 %v1019, %v1291
    %v1293 = vpop.f32.mrb[0].mxu0
    %v1294 = vadd.f32 %v1021, %v1293
    %v1295 = vpop.f32.mrb[0].mxu0
    %v1296 = vadd.f32 %v1023, %v1295
    %v1297 = vpop.f32.mrb[0].mxu0
    %v1298 = vadd.f32 %v1025, %v1297
    %1299 = vmatprep.mubr.bf16.mxu0 %v683
    %1300 = vmatmul.mubr.bf16.gmra.mrb[0].mxu0 %v682
    %v1301 = vpop.f32.mrb[0].mxu0
    %v1302 = vadd.f32 %v1029, %v1301
    %v1303 = vpop.f32.mrb[0].mxu0
    %v1304 = vadd.f32 %v1031, %v1303
    %v1305 = vpop.f32.mrb[0].mxu0
    %v1306 = vadd.f32 %v1033, %v1305
    %v1307 = vpop.f32.mrb[0].mxu0
    %v1308 = vadd.f32 %v1035, %v1307
    %1309 = vdwg.mxu0
    %v1310 = vld [vmem:[#allocation9] sm:$0xf]
    %v1311 = vld [vmem:[#allocation9 + $0x4] sm:$0xf]
    %v1312 = vld [vmem:[#allocation9 + $0x8] sm:$0xf]
    %v1313 = vld [vmem:[#allocation9 + $0xc] sm:$0xf]
    %v1314 = vld [vmem:[#allocation9 + $0x10] sm:$0xf]
    %v1315 = vld [vmem:[#allocation9 + $0x14] sm:$0xf]
    %v1316 = vld [vmem:[#allocation9 + $0x18] sm:$0xf]
    %v1317 = vld [vmem:[#allocation9 + $0x1c] sm:$0xf]
    %v1318 = vld [vmem:[#allocation9 + $0x20] sm:$0xf]
    %v1319 = vld [vmem:[#allocation9 + $0x24] sm:$0xf]
    %v1320 = vld [vmem:[#allocation9 + $0x28] sm:$0xf]
    %v1321 = vld [vmem:[#allocation9 + $0x2c] sm:$0xf]
    %v1322 = vld [vmem:[#allocation9 + $0x30] sm:$0xf]
    %v1323 = vld [vmem:[#allocation9 + $0x34] sm:$0xf]
    %v1324 = vld [vmem:[#allocation9 + $0x38] sm:$0xf]
    %v1325 = vld [vmem:[#allocation9 + $0x3c] sm:$0xf]
    %v1326 = vunpack.c.l.bf16 %v1310
    %v1327 = vunpack.c.l.bf16 %v1311
    %v1328 = vunpack.c.l.bf16 %v1312
    %v1329 = vunpack.c.l.bf16 %v1313
    %v1330 = vunpack.c.l.bf16 %v1314
    %v1331 = vunpack.c.l.bf16 %v1315
    %v1332 = vunpack.c.l.bf16 %v1316
    %v1333 = vunpack.c.l.bf16 %v1317
    %v1334 = vunpack.c.l.bf16 %v1318
    %v1335 = vunpack.c.l.bf16 %v1319
    %v1336 = vunpack.c.l.bf16 %v1320
    %v1337 = vunpack.c.l.bf16 %v1321
    %v1338 = vunpack.c.l.bf16 %v1322
    %v1339 = vunpack.c.l.bf16 %v1323
    %v1340 = vunpack.c.l.bf16 %v1324
    %v1341 = vunpack.c.l.bf16 %v1325
    %1343 = vset.pattern.permute.xlu0 0
    %1344 = vperm.xlu0 %1343, %v1326
    %v1345 = vpop.permute.xlu0 %1344
    %1348 = vset.pattern.permute.xlu0 0
    %1349 = vperm.xlu0 %1348, %v1327
    %v1350 = vpop.permute.xlu0 %1349
    %1353 = vset.pattern.permute.xlu0 0
    %1354 = vperm.xlu0 %1353, %v1328
    %v1355 = vpop.permute.xlu0 %1354
    %1358 = vset.pattern.permute.xlu0 0
    %1359 = vperm.xlu0 %1358, %v1329
    %v1360 = vpop.permute.xlu0 %1359
    %1363 = vset.pattern.permute.xlu0 0
    %1364 = vperm.xlu0 %1363, %v1330
    %v1365 = vpop.permute.xlu0 %1364
    %1368 = vset.pattern.permute.xlu0 0
    %1369 = vperm.xlu0 %1368, %v1331
    %v1370 = vpop.permute.xlu0 %1369
    %1373 = vset.pattern.permute.xlu0 0
    %1374 = vperm.xlu0 %1373, %v1332
    %v1375 = vpop.permute.xlu0 %1374
    %1378 = vset.pattern.permute.xlu0 0
    %1379 = vperm.xlu0 %1378, %v1333
    %v1380 = vpop.permute.xlu0 %1379
    %1383 = vset.pattern.permute.xlu0 0
    %1384 = vperm.xlu0 %1383, %v1334
    %v1385 = vpop.permute.xlu0 %1384
    %1388 = vset.pattern.permute.xlu0 0
    %1389 = vperm.xlu0 %1388, %v1335
    %v1390 = vpop.permute.xlu0 %1389
    %1393 = vset.pattern.permute.xlu0 0
    %1394 = vperm.xlu0 %1393, %v1336
    %v1395 = vpop.permute.xlu0 %1394
    %1398 = vset.pattern.permute.xlu0 0
    %1399 = vperm.xlu0 %1398, %v1337
    %v1400 = vpop.permute.xlu0 %1399
    %1403 = vset.pattern.permute.xlu0 0
    %1404 = vperm.xlu0 %1403, %v1338
    %v1405 = vpop.permute.xlu0 %1404
    %1408 = vset.pattern.permute.xlu0 0
    %1409 = vperm.xlu0 %1408, %v1339
    %v1410 = vpop.permute.xlu0 %1409
    %1413 = vset.pattern.permute.xlu0 0
    %1414 = vperm.xlu0 %1413, %v1340
    %v1415 = vpop.permute.xlu0 %1414
    %1418 = vset.pattern.permute.xlu0 0
    %1419 = vperm.xlu0 %1418, %v1341
    %v1420 = vpop.permute.xlu0 %1419
    %v1422 = vmul.f32 %v1232, %v1345
    %v1423 = vmul.f32 %v1234, %v1345
    %v1424 = vmul.f32 %v1236, %v1350
    %v1425 = vmul.f32 %v1238, %v1350
    %v1426 = vmul.f32 %v1242, %v1355
    %v1427 = vmul.f32 %v1244, %v1355
    %v1428 = vmul.f32 %v1246, %v1360
    %v1429 = vmul.f32 %v1248, %v1360
    %v1430 = vmul.f32 %v1252, %v1365
    %v1431 = vmul.f32 %v1254, %v1365
    %v1432 = vmul.f32 %v1256, %v1370
    %v1433 = vmul.f32 %v1258, %v1370
    %v1434 = vmul.f32 %v1262, %v1375
    %v1435 = vmul.f32 %v1264, %v1375
    %v1436 = vmul.f32 %v1266, %v1380
    %v1437 = vmul.f32 %v1268, %v1380
    %v1438 = vmul.f32 %v1272, %v1385
    %v1439 = vmul.f32 %v1274, %v1385
    %v1440 = vmul.f32 %v1276, %v1390
    %v1441 = vmul.f32 %v1278, %v1390
    %v1442 = vmul.f32 %v1282, %v1395
    %v1443 = vmul.f32 %v1284, %v1395
    %v1444 = vmul.f32 %v1286, %v1400
    %v1445 = vmul.f32 %v1288, %v1400
    %v1446 = vmul.f32 %v1292, %v1405
    %v1447 = vmul.f32 %v1294, %v1405
    %v1448 = vmul.f32 %v1296, %v1410
    %v1449 = vmul.f32 %v1298, %v1410
    %v1450 = vmul.f32 %v1302, %v1415
    %v1451 = vmul.f32 %v1304, %v1415
    %v1452 = vmul.f32 %v1306, %v1420
    %v1453 = vmul.f32 %v1308, %v1420
    %v1454 = vpack.c.bf16 %v1424, %v1422
    %v1455 = vpack.c.bf16 %v1425, %v1423
    %v1456 = vpack.c.bf16 %v1428, %v1426
    %v1457 = vpack.c.bf16 %v1429, %v1427
    %v1458 = vpack.c.bf16 %v1432, %v1430
    %v1459 = vpack.c.bf16 %v1433, %v1431
    %v1460 = vpack.c.bf16 %v1436, %v1434
    %v1461 = vpack.c.bf16 %v1437, %v1435
    %v1462 = vpack.c.bf16 %v1440, %v1438
    %v1463 = vpack.c.bf16 %v1441, %v1439
    %v1464 = vpack.c.bf16 %v1444, %v1442
    %v1465 = vpack.c.bf16 %v1445, %v1443
    %v1466 = vpack.c.bf16 %v1448, %v1446
    %v1467 = vpack.c.bf16 %v1449, %v1447
    %v1468 = vpack.c.bf16 %v1452, %v1450
    %v1469 = vpack.c.bf16 %v1453, %v1451
    %v1486 = vunpack.c.l.b16 %v1454
    %v1487 = vunpack.c.l.b16 %v1455
    %v1488 = vunpack.c.h.b16 %v1454
    %v1489 = vunpack.c.h.b16 %v1455
    %v1490 = vunpack.c.l.b16 %v1456
    %v1491 = vunpack.c.l.b16 %v1457
    %v1492 = vunpack.c.h.b16 %v1456
    %v1493 = vunpack.c.h.b16 %v1457
    %v1494 = vunpack.c.l.b16 %v1458
    %v1495 = vunpack.c.l.b16 %v1459
    %v1496 = vunpack.c.h.b16 %v1458
    %v1497 = vunpack.c.h.b16 %v1459
    %v1498 = vunpack.c.l.b16 %v1460
    %v1499 = vunpack.c.l.b16 %v1461
    %v1500 = vunpack.c.h.b16 %v1460
    %v1501 = vunpack.c.h.b16 %v1461
    %v1502 = vunpack.c.l.b16 %v1462
    %v1503 = vunpack.c.l.b16 %v1463
    %v1504 = vunpack.c.h.b16 %v1462
    %v1505 = vunpack.c.h.b16 %v1463
    %v1506 = vunpack.c.l.b16 %v1464
    %v1507 = vunpack.c.l.b16 %v1465
    %v1508 = vunpack.c.h.b16 %v1464
    %v1509 = vunpack.c.h.b16 %v1465
    %v1510 = vunpack.c.l.b16 %v1466
    %v1511 = vunpack.c.l.b16 %v1467
    %v1512 = vunpack.c.h.b16 %v1466
    %v1513 = vunpack.c.h.b16 %v1467
    %v1514 = vunpack.c.l.b16 %v1468
    %v1515 = vunpack.c.l.b16 %v1469
    %v1516 = vunpack.c.h.b16 %v1468
    %v1517 = vunpack.c.h.b16 %v1469
    %v1518 = vpack.c.b16 %v1487, %v1486
    %v1519 = vpack.c.b16 %v1489, %v1488
    %v1520 = vpack.c.b16 %v1491, %v1490
    %v1521 = vpack.c.b16 %v1493, %v1492
    %v1522 = vpack.c.b16 %v1495, %v1494
    %v1523 = vpack.c.b16 %v1497, %v1496
    %v1524 = vpack.c.b16 %v1499, %v1498
    %v1525 = vpack.c.b16 %v1501, %v1500
    %v1526 = vpack.c.b16 %v1503, %v1502
    %v1527 = vpack.c.b16 %v1505, %v1504
    %v1528 = vpack.c.b16 %v1507, %v1506
    %v1529 = vpack.c.b16 %v1509, %v1508
    %v1530 = vpack.c.b16 %v1511, %v1510
    %v1531 = vpack.c.b16 %v1513, %v1512
    %v1532 = vpack.c.b16 %v1515, %v1514
    %v1533 = vpack.c.b16 %v1517, %v1516
    %1550 = vst [vmem:[#allocation13] sm:$0xff] %v1518
    %1551 = vst [vmem:[#allocation13 + $0x8] sm:$0xff] %v1519
    %1552 = vst [vmem:[#allocation13 + $0x10] sm:$0xff] %v1520
    %1553 = vst [vmem:[#allocation13 + $0x18] sm:$0xff] %v1521
    %1554 = vst [vmem:[#allocation13 + $0x20] sm:$0xff] %v1522
    %1555 = vst [vmem:[#allocation13 + $0x28] sm:$0xff] %v1523
    %1556 = vst [vmem:[#allocation13 + $0x30] sm:$0xff] %v1524
    %1557 = vst [vmem:[#allocation13 + $0x38] sm:$0xff] %v1525
    %1558 = vst [vmem:[#allocation13 + $0x40] sm:$0xff] %v1526
    %1559 = vst [vmem:[#allocation13 + $0x48] sm:$0xff] %v1527
    %1560 = vst [vmem:[#allocation13 + $0x50] sm:$0xff] %v1528
    %1561 = vst [vmem:[#allocation13 + $0x58] sm:$0xff] %v1529
    %1562 = vst [vmem:[#allocation13 + $0x60] sm:$0xff] %v1530
    %1563 = vst [vmem:[#allocation13 + $0x68] sm:$0xff] %v1531
    %1564 = vst [vmem:[#allocation13 + $0x70] sm:$0xff] %v1532
    %1565 = vst [vmem:[#allocation13 + $0x78] sm:$0xff] %v1533
    // Predicated region
    $region54: #{tpu_custom_call.1} parent=1 // pred_check
      _
    $region55: #{tpu_custom_call.1} parent=1 // pred_check_branch
      %1567 = sbr.rel (0) target = $region57
    $region56: #{tpu_custom_call.1} parent=1 // pred_region
      %s1569 = ssub.s32 2048, 2048
      %1570 = vsyncadd [#allocation6], %s1569
      %s1571 = sshll.u32 [#allocation13], 4
      %s1572 = int_to_ptr.vmem [resolvable:$true] %s1571
      %1577 = dma.vmem_to_hbm [thread:$0]  %s1572, 2048, %s7, [#allocation6], 128, 128, 8
    $region57: #{tpu_custom_call.1} parent=1 // pred_fallthru
      _
    // Predicated region
    $region58: #{tpu_custom_call.1} parent=1 // pred_check
      _
    $region59: #{tpu_custom_call.1} parent=1 // pred_check_branch
      %1579 = sbr.rel (0) target = $region61
    $region60: #{tpu_custom_call.1} parent=1 // pred_region
      %1580 = dma.done [#allocation6], 2048
    $region61: #{tpu_custom_call.1} parent=1 // pred_fallthru
      _
    %1581 = vsyncpa [#allocation5], 1
    %1582 = vsyncpa [#allocation8], 1
    %1583 = vsyncpa [#allocation11], 1
    %1584 = vsyncpa [#allocation6], 1

</llo_original>
